<compile_context>
chip_gen: v7x
topology: tpu7x:2x2x1
jax: 0.10.0
libtpu: 0.0.40
codegen_flags: <defaults>
</compile_context>

<pallas_src>
import functools

import jax
import jax.numpy as jnp
from jax.experimental import pallas as pl
from jax.experimental.pallas import tpu as pltpu

H1 = 512   # first hidden width
H2 = 256   # second hidden width
NP = 128   # padded output lanes for the 256->1 head (sliced to 1 outside)


def _round_up(x, m):
    return ((x + m - 1) // m) * m


def _discriminator_kernel(x_ref, w1_ref, b1_ref, w2_ref, b2_ref, w3_ref, b3_ref, o_ref):
    """One batch tile: Linear->LeakyReLU->Linear->LeakyReLU->Linear(padded)->Sigmoid."""
    x = x_ref[...]                                                    # (TILE_B, D_pad) bf16

    h1 = jnp.dot(x, w1_ref[...], preferred_element_type=jnp.float32)  # (TILE_B, 512) f32
    h1 = h1 + b1_ref[...]
    h1 = jnp.where(h1 > 0, h1, 0.2 * h1)                              # LeakyReLU(0.2)
    h1 = h1.astype(jnp.bfloat16)

    h2 = jnp.dot(h1, w2_ref[...], preferred_element_type=jnp.float32)  # (TILE_B, 256) f32
    h2 = h2 + b2_ref[...]
    h2 = jnp.where(h2 > 0, h2, 0.2 * h2)                              # LeakyReLU(0.2)
    h2 = h2.astype(jnp.bfloat16)

    h3 = jnp.dot(h2, w3_ref[...], preferred_element_type=jnp.float32)  # (TILE_B, 128) f32
    h3 = h3 + b3_ref[...]
    o_ref[...] = jax.nn.sigmoid(h3)                                   # lane-dense store


@functools.partial(jax.jit, static_argnames=("tile_b",))
def discriminator_forward(img, params, *, tile_b=256):
    """img: (B, C, H, W) float32.  Returns validity: (B, 1) float32."""
    B = img.shape[0]
    x = img.reshape(B, -1).astype(jnp.float32)                        # flatten NCHW (glue)
    D = x.shape[1]
    w1, b1, w2, b2, w3, b3 = params

    # --- alignment / padding (numerically exact: padded rows/cols are zero) ---
    D_pad = _round_up(D, 256)                   # aligned K for the big matmul
    tile_b = min(tile_b, _round_up(B, 128))     # don't over-pad tiny batches
    B_pad = _round_up(B, tile_b)
    num_tiles = B_pad // tile_b

    x_p = jnp.zeros((B_pad, D_pad), jnp.bfloat16).at[:B, :D].set(x.astype(jnp.bfloat16))
    w1_p = jnp.zeros((D_pad, H1), jnp.bfloat16).at[:D, :].set(w1.astype(jnp.bfloat16))
    w2_b = w2.astype(jnp.bfloat16)
    # Pad the 256->1 head to 128 output lanes (column 0 is the real one).
    w3_p = jnp.zeros((H2, NP), jnp.bfloat16).at[:, :1].set(w3.astype(jnp.bfloat16))
    b3_p = jnp.zeros((1, NP), jnp.float32).at[:, :1].set(b3)

    full = lambda shape: pl.BlockSpec(shape, lambda i: (0, 0))        # resident across grid

    flops = 2 * B_pad * (D_pad * H1 + H1 * H2 + H2 * NP)
    bytes_accessed = (
        B_pad * D_pad * 2
        + (D_pad * H1 + H1 * H2 + H2 * NP) * 2
        + (H1 + H2 + NP) * 4
        + B_pad * NP * 4
    )

    out = pl.pallas_call(
        _discriminator_kernel,
        out_shape=jax.ShapeDtypeStruct((B_pad, NP), jnp.float32),
        grid_spec=pltpu.PrefetchScalarGridSpec(
            num_scalar_prefetch=0,
            grid=(num_tiles,),
            in_specs=[
                pl.BlockSpec((tile_b, D_pad), lambda i: (i, 0)),      # streamed x tile
                full((D_pad, H1)), full((1, H1)),                     # layer 1
                full((H1, H2)), full((1, H2)),                        # layer 2
                full((H2, NP)), full((1, NP)),                        # padded head
            ],
            out_specs=pl.BlockSpec((tile_b, NP), lambda i: (i, 0)),
        ),
        compiler_params=pltpu.CompilerParams(
            dimension_semantics=("parallel",),                        # megacore on v7x
            vmem_limit_bytes=32 * 1024 * 1024,
        ),
        cost_estimate=pl.CostEstimate(
            flops=flops, transcendentals=B_pad * NP, bytes_accessed=bytes_accessed
        ),
    )(x_p, w1_p, b1, w2_b, b2, w3_p, b3_p)

    return out[:B, :1]                                                # drop padding


def init_params(key, in_features):
    """Deterministic init mimicking torch.nn.Linear defaults (uniform +-1/sqrt(fan_in)).

    Weights are stored transposed, shape (in, out), so the kernel does x @ W.
    """
    dims = [(in_features, H1), (H1, H2), (H2, 1)]
    params = []
    for (fan_in, fan_out) in dims:
        key, kw, kb = jax.random.split(key, 3)
        bound = 1.0 / jnp.sqrt(float(fan_in))
        w = jax.random.uniform(kw, (fan_in, fan_out), jnp.float32, -bound, bound)
        b = jax.random.uniform(kb, (1, fan_out), jnp.float32, -bound, bound)
        params += [w, b]
    return tuple(params)


def reference_forward(img, params):
    """Pure-JAX f32 reference of the same forward pass."""
    x = img.reshape(img.shape[0], -1)
    w1, b1, w2, b2, w3, b3 = params
    h = x @ w1 + b1
    h = jnp.where(h > 0, h, 0.2 * h)
    h = h @ w2 + b2
    h = jnp.where(h > 0, h, 0.2 * h)
    h = h @ w3 + b3
    return jax.nn.sigmoid(h)


if __name__ == "__main__":
    key = jax.random.PRNGKey(0)
    img_shape = (1, 16, 16)          # (C, H, W) -> D = 256 input features
    batch = 2

    k_img, k_params = jax.random.split(key)
    img = jax.random.normal(k_img, (batch,) + img_shape, dtype=jnp.float32)
    params = init_params(k_params, int(jnp.prod(jnp.array(img_shape))))

    out = discriminator_forward(img, params)
    out = jax.block_until_ready(out)

    ref = reference_forward(img, params)
    assert out.shape == (batch, 1)
    # bf16 MXU operands (f32 accumulation) -> compare post-sigmoid with a loose tol.
    assert jnp.allclose(out, ref, atol=2e-2, rtol=0), (out, ref)

    print("KERNEL_OK")
</pallas_src>

<mosaic_0001>
module attributes {stable_mosaic.version = 11 : i64} {
  func.func @_discriminator_kernel(%arg0: i32, %arg1: memref<128x256xbf16, #tpu.memory_space<vmem>>, %arg2: memref<256x512xbf16, #tpu.memory_space<vmem>>, %arg3: memref<1x512xf32, #tpu.memory_space<vmem>>, %arg4: memref<512x256xbf16, #tpu.memory_space<vmem>>, %arg5: memref<1x256xf32, #tpu.memory_space<vmem>>, %arg6: memref<256x128xbf16, #tpu.memory_space<vmem>>, %arg7: memref<1x128xf32, #tpu.memory_space<vmem>>, %arg8: memref<128x128xf32, #tpu.memory_space<vmem>>) attributes {dimension_semantics = [#tpu.dimension_semantics<parallel>], iteration_bounds = array<i64: 1>, scalar_prefetch = 0 : i64, scratch_operands = 0 : i64, tpu.core_type = #tpu.core_type<tc>, window_params = [{transform_indices = @transform_0, window_bounds = array<i64: 128, 256>}, {pipeline_mode = #tpu.pipeline_mode<synchronous>, transform_indices = @transform_1, window_bounds = array<i64: 256, 512>}, {pipeline_mode = #tpu.pipeline_mode<synchronous>, transform_indices = @transform_2, window_bounds = array<i64: 1, 512>}, {pipeline_mode = #tpu.pipeline_mode<synchronous>, transform_indices = @transform_3, window_bounds = array<i64: 512, 256>}, {pipeline_mode = #tpu.pipeline_mode<synchronous>, transform_indices = @transform_4, window_bounds = array<i64: 1, 256>}, {pipeline_mode = #tpu.pipeline_mode<synchronous>, transform_indices = @transform_5, window_bounds = array<i64: 256, 128>}, {pipeline_mode = #tpu.pipeline_mode<synchronous>, transform_indices = @transform_6, window_bounds = array<i64: 1, 128>}, {transform_indices = @transform_7, window_bounds = array<i64: 128, 128>}]} {
    %c0 = arith.constant 0 : index
    %c0_0 = arith.constant 0 : index
    %0 = vector.load %arg1[%c0, %c0_0] : memref<128x256xbf16, #tpu.memory_space<vmem>>, vector<128x256xbf16>
    %c0_1 = arith.constant 0 : index
    %c0_2 = arith.constant 0 : index
    %1 = vector.load %arg2[%c0_1, %c0_2] : memref<256x512xbf16, #tpu.memory_space<vmem>>, vector<256x512xbf16>
    %cst = arith.constant dense<0.000000e+00> : vector<128x512xf32>
    %2 = tpu.matmul %0, %1, %cst {dimension_numbers = #tpu.dot_dimension_numbers<[1], [0], [0], [1], [0, 0, 1, 1], [], []>} : vector<128x256xbf16>, vector<256x512xbf16>, vector<128x512xf32> -> vector<128x512xf32>
    %c0_3 = arith.constant 0 : index
    %c0_4 = arith.constant 0 : index
    %3 = vector.load %arg3[%c0_3, %c0_4] : memref<1x512xf32, #tpu.memory_space<vmem>>, vector<1x512xf32>
    %4 = vector.broadcast %3 : vector<1x512xf32> to vector<128x512xf32>
    %5 = arith.addf %2, %4 : vector<128x512xf32>
    %cst_5 = arith.constant 0.000000e+00 : f32
    %6 = vector.broadcast %cst_5 : f32 to vector<128x512xf32>
    %7 = arith.cmpf ogt, %5, %6 : vector<128x512xf32>
    %cst_6 = arith.constant 2.000000e-01 : f32
    %8 = vector.broadcast %cst_6 : f32 to vector<128x512xf32>
    %9 = arith.mulf %8, %5 : vector<128x512xf32>
    %10 = arith.select %7, %5, %9 : vector<128x512xi1>, vector<128x512xf32>
    %11 = arith.truncf %10 : vector<128x512xf32> to vector<128x512xbf16>
    %c0_7 = arith.constant 0 : index
    %c0_8 = arith.constant 0 : index
    %12 = vector.load %arg4[%c0_7, %c0_8] : memref<512x256xbf16, #tpu.memory_space<vmem>>, vector<512x256xbf16>
    %cst_9 = arith.constant dense<0.000000e+00> : vector<128x256xf32>
    %13 = tpu.matmul %11, %12, %cst_9 {dimension_numbers = #tpu.dot_dimension_numbers<[1], [0], [0], [1], [0, 0, 1, 1], [], []>} : vector<128x512xbf16>, vector<512x256xbf16>, vector<128x256xf32> -> vector<128x256xf32>
    %c0_10 = arith.constant 0 : index
    %c0_11 = arith.constant 0 : index
    %14 = vector.load %arg5[%c0_10, %c0_11] : memref<1x256xf32, #tpu.memory_space<vmem>>, vector<1x256xf32>
    %15 = vector.broadcast %14 : vector<1x256xf32> to vector<128x256xf32>
    %16 = arith.addf %13, %15 : vector<128x256xf32>
    %cst_12 = arith.constant 0.000000e+00 : f32
    %17 = vector.broadcast %cst_12 : f32 to vector<128x256xf32>
    %18 = arith.cmpf ogt, %16, %17 : vector<128x256xf32>
    %cst_13 = arith.constant 2.000000e-01 : f32
    %19 = vector.broadcast %cst_13 : f32 to vector<128x256xf32>
    %20 = arith.mulf %19, %16 : vector<128x256xf32>
    %21 = arith.select %18, %16, %20 : vector<128x256xi1>, vector<128x256xf32>
    %22 = arith.truncf %21 : vector<128x256xf32> to vector<128x256xbf16>
    %c0_14 = arith.constant 0 : index
    %c0_15 = arith.constant 0 : index
    %23 = vector.load %arg6[%c0_14, %c0_15] : memref<256x128xbf16, #tpu.memory_space<vmem>>, vector<256x128xbf16>
    %cst_16 = arith.constant dense<0.000000e+00> : vector<128x128xf32>
    %24 = tpu.matmul %22, %23, %cst_16 {dimension_numbers = #tpu.dot_dimension_numbers<[1], [0], [0], [1], [0, 0, 1, 1], [], []>} : vector<128x256xbf16>, vector<256x128xbf16>, vector<128x128xf32> -> vector<128x128xf32>
    %c0_17 = arith.constant 0 : index
    %c0_18 = arith.constant 0 : index
    %25 = vector.load %arg7[%c0_17, %c0_18] : memref<1x128xf32, #tpu.memory_space<vmem>>, vector<1x128xf32>
    %26 = vector.broadcast %25 : vector<1x128xf32> to vector<128x128xf32>
    %27 = arith.addf %24, %26 : vector<128x128xf32>
    %28 = arith.negf %27 : vector<128x128xf32>
    %29 = math.exp %28 : vector<128x128xf32>
    %cst_19 = arith.constant 1.000000e+00 : f32
    %30 = vector.broadcast %cst_19 : f32 to vector<128x128xf32>
    %31 = arith.addf %30, %29 : vector<128x128xf32>
    %32 = arith.divf %30, %31 : vector<128x128xf32>
    %c0_20 = arith.constant 0 : index
    %c0_21 = arith.constant 0 : index
    %33 = vector.load %arg8[%c0_20, %c0_21] : memref<128x128xf32, #tpu.memory_space<vmem>>, vector<128x128xf32>
    tpu.vector_store %arg8[%c0_20, %c0_21], %32 {strides = array<i32>} : memref<128x128xf32, #tpu.memory_space<vmem>>, vector<128x128xf32>,
    return
  }
  func.func @transform_0(%arg0: i32) -> (i32, i32) {
    %c0_i32 = arith.constant 0 : i32
    %c0_i32_0 = arith.constant 0 : i32
    return %arg0, %c0_i32 : i32, i32
  }
  func.func @transform_1(%arg0: i32) -> (i32, i32) {
    %c0_i32 = arith.constant 0 : i32
    %c0_i32_0 = arith.constant 0 : i32
    %c0_i32_1 = arith.constant 0 : i32
    return %c0_i32, %c0_i32_0 : i32, i32
  }
  func.func @transform_2(%arg0: i32) -> (i32, i32) {
    %c0_i32 = arith.constant 0 : i32
    %c0_i32_0 = arith.constant 0 : i32
    %c0_i32_1 = arith.constant 0 : i32
    return %c0_i32, %c0_i32_0 : i32, i32
  }
  func.func @transform_3(%arg0: i32) -> (i32, i32) {
    %c0_i32 = arith.constant 0 : i32
    %c0_i32_0 = arith.constant 0 : i32
    %c0_i32_1 = arith.constant 0 : i32
    return %c0_i32, %c0_i32_0 : i32, i32
  }
  func.func @transform_4(%arg0: i32) -> (i32, i32) {
    %c0_i32 = arith.constant 0 : i32
    %c0_i32_0 = arith.constant 0 : i32
    %c0_i32_1 = arith.constant 0 : i32
    return %c0_i32, %c0_i32_0 : i32, i32
  }
  func.func @transform_5(%arg0: i32) -> (i32, i32) {
    %c0_i32 = arith.constant 0 : i32
    %c0_i32_0 = arith.constant 0 : i32
    %c0_i32_1 = arith.constant 0 : i32
    return %c0_i32, %c0_i32_0 : i32, i32
  }
  func.func @transform_6(%arg0: i32) -> (i32, i32) {
    %c0_i32 = arith.constant 0 : i32
    %c0_i32_0 = arith.constant 0 : i32
    %c0_i32_1 = arith.constant 0 : i32
    return %c0_i32, %c0_i32_0 : i32, i32
  }
  func.func @transform_7(%arg0: i32) -> (i32, i32) {
    %c0_i32 = arith.constant 0 : i32
    %c0_i32_0 = arith.constant 0 : i32
    return %arg0, %c0_i32 : i32, i32
  }
}

</mosaic_0001>

<llo_original>
// kernel: discriminator_forward.1
$region0: #{discriminator_forward.1}
  #allocation0 [shape = 'u32[]', space=smem, size = 0x4, offset = 0x4, fixed_abs, tag = 'smem constant byte address 0x4 - core index']
  #allocation1 [shape = 'u32[144,128]{1,0:T(1,128)}', space=vmem, size = 0x12000, scoped, tag = 'internal scratch']
  %s0 = inlined_call_operand.vmem [shape: bf16[128,256], index: 0, kind: input, shape index: {}]
  %s1 = inlined_call_operand.vmem [shape: bf16[256,512], index: 1, kind: input, shape index: {}]
  %s2 = inlined_call_operand.vmem [shape: f32[1,512], index: 2, kind: input, shape index: {}]
  %s3 = inlined_call_operand.vmem [shape: bf16[512,256], index: 3, kind: input, shape index: {}]
  %s4 = inlined_call_operand.vmem [shape: f32[1,256], index: 4, kind: input, shape index: {}]
  %s5 = inlined_call_operand.vmem [shape: bf16[256,128], index: 5, kind: input, shape index: {}]
  %s6 = inlined_call_operand.vmem [shape: f32[1,128], index: 6, kind: input, shape index: {}]
  %s7 = inlined_call_operand.vmem [shape: f32[128,128], index: 7, kind: output, shape index: {}]
  %s8 = sld [smem:[#allocation0]]
  $region38: #{discriminator_forward.1} parent=0
    _
  %s10 = ssub.s32 1, %s8
  %s11 = scalar_select 0, %s10, %s8
  // Predicated region
  $region2: #{discriminator_forward.1} parent=0 // pred_check
    _
  $region3: #{discriminator_forward.1} parent=0 // pred_check_branch
    %13 = sbr.rel (0) target = $region5
  $region4: #{discriminator_forward.1} parent=0 // pred_region
    _
  $region5: #{discriminator_forward.1} parent=0 // pred_fallthru
    _
  // Predicated region
  $region6: #{discriminator_forward.1} parent=0 // pred_check
    _
  $region7: #{discriminator_forward.1} parent=0 // pred_check_branch
    %15 = sbr.rel (0) target = $region9
  $region8: #{discriminator_forward.1} parent=0 // pred_region
    _
  $region9: #{discriminator_forward.1} parent=0 // pred_fallthru
    _
  // Predicated region
  $region10: #{discriminator_forward.1} parent=0 // pred_check
    _
  $region11: #{discriminator_forward.1} parent=0 // pred_check_branch
    %17 = sbr.rel (0) target = $region13
  $region12: #{discriminator_forward.1} parent=0 // pred_region
    _
  $region13: #{discriminator_forward.1} parent=0 // pred_fallthru
    _
  // Predicated region
  $region14: #{discriminator_forward.1} parent=0 // pred_check
    _
  $region15: #{discriminator_forward.1} parent=0 // pred_check_branch
    %19 = sbr.rel (0) target = $region17
  $region16: #{discriminator_forward.1} parent=0 // pred_region
    _
  $region17: #{discriminator_forward.1} parent=0 // pred_fallthru
    _
  // Predicated region
  $region18: #{discriminator_forward.1} parent=0 // pred_check
    _
  $region19: #{discriminator_forward.1} parent=0 // pred_check_branch
    %21 = sbr.rel (0) target = $region21
  $region20: #{discriminator_forward.1} parent=0 // pred_region
    _
  $region21: #{discriminator_forward.1} parent=0 // pred_fallthru
    _
  // Predicated region
  $region22: #{discriminator_forward.1} parent=0 // pred_check
    _
  $region23: #{discriminator_forward.1} parent=0 // pred_check_branch
    %23 = sbr.rel (0) target = $region25
  $region24: #{discriminator_forward.1} parent=0 // pred_region
    _
  $region25: #{discriminator_forward.1} parent=0 // pred_fallthru
    _
  // Predicated region
  $region26: #{discriminator_forward.1} parent=0 // pred_check
    _
  $region27: #{discriminator_forward.1} parent=0 // pred_check_branch
    %25 = sbr.rel (0) target = $region29
  $region28: #{discriminator_forward.1} parent=0 // pred_region
    _
  $region29: #{discriminator_forward.1} parent=0 // pred_fallthru
    _
  %v27 = vld [vmem:[%s0] sm:$0xff]
  %v28 = vld [vmem:[%s0 + $0x8] sm:$0xff]
  %v29 = vld [vmem:[%s0 + $0x10] sm:$0xff]
  %v30 = vld [vmem:[%s0 + $0x18] sm:$0xff]
  %v31 = vld [vmem:[%s0 + $0x20] sm:$0xff]
  %v32 = vld [vmem:[%s0 + $0x28] sm:$0xff]
  %v33 = vld [vmem:[%s0 + $0x30] sm:$0xff]
  %v34 = vld [vmem:[%s0 + $0x38] sm:$0xff]
  %v35 = vld [vmem:[%s0 + $0x40] sm:$0xff]
  %v36 = vld [vmem:[%s0 + $0x48] sm:$0xff]
  %v37 = vld [vmem:[%s0 + $0x50] sm:$0xff]
  %v38 = vld [vmem:[%s0 + $0x58] sm:$0xff]
  %v39 = vld [vmem:[%s0 + $0x60] sm:$0xff]
  %v40 = vld [vmem:[%s0 + $0x68] sm:$0xff]
  %v41 = vld [vmem:[%s0 + $0x70] sm:$0xff]
  %v42 = vld [vmem:[%s0 + $0x78] sm:$0xff]
  %v43 = vld [vmem:[%s1] sm:$0xff]
  %v44 = vld [vmem:[%s1 + $0x8] sm:$0xff]
  %v45 = vld [vmem:[%s1 + $0x10] sm:$0xff]
  %v46 = vld [vmem:[%s1 + $0x18] sm:$0xff]
  %v47 = vld [vmem:[%s1 + $0x20] sm:$0xff]
  %v48 = vld [vmem:[%s1 + $0x28] sm:$0xff]
  %v49 = vld [vmem:[%s1 + $0x30] sm:$0xff]
  %v50 = vld [vmem:[%s1 + $0x38] sm:$0xff]
  %v51 = vld [vmem:[%s1 + $0x40] sm:$0xff]
  %v52 = vld [vmem:[%s1 + $0x48] sm:$0xff]
  %v53 = vld [vmem:[%s1 + $0x50] sm:$0xff]
  %v54 = vld [vmem:[%s1 + $0x58] sm:$0xff]
  %v55 = vld [vmem:[%s1 + $0x60] sm:$0xff]
  %v56 = vld [vmem:[%s1 + $0x68] sm:$0xff]
  %v57 = vld [vmem:[%s1 + $0x70] sm:$0xff]
  %v58 = vld [vmem:[%s1 + $0x78] sm:$0xff]
  %v59 = vld [vmem:[%s1 + $0x80] sm:$0xff]
  %v60 = vld [vmem:[%s1 + $0x88] sm:$0xff]
  %v61 = vld [vmem:[%s1 + $0x90] sm:$0xff]
  %v62 = vld [vmem:[%s1 + $0x98] sm:$0xff]
  %v63 = vld [vmem:[%s1 + $0xa0] sm:$0xff]
  %v64 = vld [vmem:[%s1 + $0xa8] sm:$0xff]
  %v65 = vld [vmem:[%s1 + $0xb0] sm:$0xff]
  %v66 = vld [vmem:[%s1 + $0xb8] sm:$0xff]
  %v67 = vld [vmem:[%s1 + $0xc0] sm:$0xff]
  %v68 = vld [vmem:[%s1 + $0xc8] sm:$0xff]
  %v69 = vld [vmem:[%s1 + $0xd0] sm:$0xff]
  %v70 = vld [vmem:[%s1 + $0xd8] sm:$0xff]
  %v71 = vld [vmem:[%s1 + $0xe0] sm:$0xff]
  %v72 = vld [vmem:[%s1 + $0xe8] sm:$0xff]
  %v73 = vld [vmem:[%s1 + $0xf0] sm:$0xff]
  %v74 = vld [vmem:[%s1 + $0xf8] sm:$0xff]
  %v75 = vld [vmem:[%s1 + $0x100] sm:$0xff]
  %v76 = vld [vmem:[%s1 + $0x108] sm:$0xff]
  %v77 = vld [vmem:[%s1 + $0x110] sm:$0xff]
  %v78 = vld [vmem:[%s1 + $0x118] sm:$0xff]
  %v79 = vld [vmem:[%s1 + $0x120] sm:$0xff]
  %v80 = vld [vmem:[%s1 + $0x128] sm:$0xff]
  %v81 = vld [vmem:[%s1 + $0x130] sm:$0xff]
  %v82 = vld [vmem:[%s1 + $0x138] sm:$0xff]
  %v83 = vld [vmem:[%s1 + $0x140] sm:$0xff]
  %v84 = vld [vmem:[%s1 + $0x148] sm:$0xff]
  %v85 = vld [vmem:[%s1 + $0x150] sm:$0xff]
  %v86 = vld [vmem:[%s1 + $0x158] sm:$0xff]
  %v87 = vld [vmem:[%s1 + $0x160] sm:$0xff]
  %v88 = vld [vmem:[%s1 + $0x168] sm:$0xff]
  %v89 = vld [vmem:[%s1 + $0x170] sm:$0xff]
  %v90 = vld [vmem:[%s1 + $0x178] sm:$0xff]
  %v91 = vld [vmem:[%s1 + $0x180] sm:$0xff]
  %v92 = vld [vmem:[%s1 + $0x188] sm:$0xff]
  %v93 = vld [vmem:[%s1 + $0x190] sm:$0xff]
  %v94 = vld [vmem:[%s1 + $0x198] sm:$0xff]
  %v95 = vld [vmem:[%s1 + $0x1a0] sm:$0xff]
  %v96 = vld [vmem:[%s1 + $0x1a8] sm:$0xff]
  %v97 = vld [vmem:[%s1 + $0x1b0] sm:$0xff]
  %v98 = vld [vmem:[%s1 + $0x1b8] sm:$0xff]
  %v99 = vld [vmem:[%s1 + $0x1c0] sm:$0xff]
  %v100 = vld [vmem:[%s1 + $0x1c8] sm:$0xff]
  %v101 = vld [vmem:[%s1 + $0x1d0] sm:$0xff]
  %v102 = vld [vmem:[%s1 + $0x1d8] sm:$0xff]
  %v103 = vld [vmem:[%s1 + $0x1e0] sm:$0xff]
  %v104 = vld [vmem:[%s1 + $0x1e8] sm:$0xff]
  %v105 = vld [vmem:[%s1 + $0x1f0] sm:$0xff]
  %v106 = vld [vmem:[%s1 + $0x1f8] sm:$0xff]
  %v107 = vld [vmem:[%s2] sm:$0xf]
  %v109 = vlaneseq
  %v110 = vshrl.u32 %v109, 7
  %v111 = vsub.s32 0, %v110
  %v112 = vrot.slane %v107, %v111
  %v113 = vlaneseq
  %v114 = vshrl.u32 %v113, 7
  %v115 = vsub.s32 1, %v114
  %v116 = vrot.slane %v107, %v115
  %v117 = vlaneseq
  %v118 = vshrl.u32 %v117, 7
  %v119 = vsub.s32 2, %v118
  %v120 = vrot.slane %v107, %v119
  %v121 = vlaneseq
  %v122 = vshrl.u32 %v121, 7
  %v123 = vsub.s32 3, %v122
  %v124 = vrot.slane %v107, %v123
  %v145 = vunpack.c.l.b16 %v27
  %v146 = vunpack.c.h.b16 %v27
  %v147 = vunpack.c.l.b16 %v28
  %v148 = vunpack.c.h.b16 %v28
  %v149 = vunpack.c.l.b16 %v29
  %v150 = vunpack.c.h.b16 %v29
  %v151 = vunpack.c.l.b16 %v30
  %v152 = vunpack.c.h.b16 %v30
  %v153 = vunpack.c.l.b16 %v31
  %v154 = vunpack.c.h.b16 %v31
  %v155 = vunpack.c.l.b16 %v32
  %v156 = vunpack.c.h.b16 %v32
  %v157 = vunpack.c.l.b16 %v33
  %v158 = vunpack.c.h.b16 %v33
  %v159 = vunpack.c.l.b16 %v34
  %v160 = vunpack.c.h.b16 %v34
  %v161 = vunpack.c.l.b16 %v35
  %v162 = vunpack.c.h.b16 %v35
  %v163 = vunpack.c.l.b16 %v36
  %v164 = vunpack.c.h.b16 %v36
  %v165 = vunpack.c.l.b16 %v37
  %v166 = vunpack.c.h.b16 %v37
  %v167 = vunpack.c.l.b16 %v38
  %v168 = vunpack.c.h.b16 %v38
  %v169 = vunpack.c.l.b16 %v39
  %v170 = vunpack.c.h.b16 %v39
  %v171 = vunpack.c.l.b16 %v40
  %v172 = vunpack.c.h.b16 %v40
  %v173 = vunpack.c.l.b16 %v41
  %v174 = vunpack.c.h.b16 %v41
  %v175 = vunpack.c.l.b16 %v42
  %v176 = vunpack.c.h.b16 %v42
  %v177 = vpack.c.b16 %v147, %v145
  %v178 = vpack.c.b16 %v148, %v146
  %v179 = vpack.c.b16 %v151, %v149
  %v180 = vpack.c.b16 %v152, %v150
  %v181 = vpack.c.b16 %v155, %v153
  %v182 = vpack.c.b16 %v156, %v154
  %v183 = vpack.c.b16 %v159, %v157
  %v184 = vpack.c.b16 %v160, %v158
  %v185 = vpack.c.b16 %v163, %v161
  %v186 = vpack.c.b16 %v164, %v162
  %v187 = vpack.c.b16 %v167, %v165
  %v188 = vpack.c.b16 %v168, %v166
  %v189 = vpack.c.b16 %v171, %v169
  %v190 = vpack.c.b16 %v172, %v170
  %v191 = vpack.c.b16 %v175, %v173
  %v192 = vpack.c.b16 %v176, %v174
  %v273 = vunpack.c.l.b16 %v43
  %v274 = vunpack.c.h.b16 %v43
  %v275 = vunpack.c.l.b16 %v44
  %v276 = vunpack.c.h.b16 %v44
  %v277 = vunpack.c.l.b16 %v45
  %v278 = vunpack.c.h.b16 %v45
  %v279 = vunpack.c.l.b16 %v46
  %v280 = vunpack.c.h.b16 %v46
  %v281 = vunpack.c.l.b16 %v47
  %v282 = vunpack.c.h.b16 %v47
  %v283 = vunpack.c.l.b16 %v48
  %v284 = vunpack.c.h.b16 %v48
  %v285 = vunpack.c.l.b16 %v49
  %v286 = vunpack.c.h.b16 %v49
  %v287 = vunpack.c.l.b16 %v50
  %v288 = vunpack.c.h.b16 %v50
  %v289 = vunpack.c.l.b16 %v51
  %v290 = vunpack.c.h.b16 %v51
  %v291 = vunpack.c.l.b16 %v52
  %v292 = vunpack.c.h.b16 %v52
  %v293 = vunpack.c.l.b16 %v53
  %v294 = vunpack.c.h.b16 %v53
  %v295 = vunpack.c.l.b16 %v54
  %v296 = vunpack.c.h.b16 %v54
  %v297 = vunpack.c.l.b16 %v55
  %v298 = vunpack.c.h.b16 %v55
  %v299 = vunpack.c.l.b16 %v56
  %v300 = vunpack.c.h.b16 %v56
  %v301 = vunpack.c.l.b16 %v57
  %v302 = vunpack.c.h.b16 %v57
  %v303 = vunpack.c.l.b16 %v58
  %v304 = vunpack.c.h.b16 %v58
  %v305 = vunpack.c.l.b16 %v59
  %v306 = vunpack.c.h.b16 %v59
  %v307 = vunpack.c.l.b16 %v60
  %v308 = vunpack.c.h.b16 %v60
  %v309 = vunpack.c.l.b16 %v61
  %v310 = vunpack.c.h.b16 %v61
  %v311 = vunpack.c.l.b16 %v62
  %v312 = vunpack.c.h.b16 %v62
  %v313 = vunpack.c.l.b16 %v63
  %v314 = vunpack.c.h.b16 %v63
  %v315 = vunpack.c.l.b16 %v64
  %v316 = vunpack.c.h.b16 %v64
  %v317 = vunpack.c.l.b16 %v65
  %v318 = vunpack.c.h.b16 %v65
  %v319 = vunpack.c.l.b16 %v66
  %v320 = vunpack.c.h.b16 %v66
  %v321 = vunpack.c.l.b16 %v67
  %v322 = vunpack.c.h.b16 %v67
  %v323 = vunpack.c.l.b16 %v68
  %v324 = vunpack.c.h.b16 %v68
  %v325 = vunpack.c.l.b16 %v69
  %v326 = vunpack.c.h.b16 %v69
  %v327 = vunpack.c.l.b16 %v70
  %v328 = vunpack.c.h.b16 %v70
  %v329 = vunpack.c.l.b16 %v71
  %v330 = vunpack.c.h.b16 %v71
  %v331 = vunpack.c.l.b16 %v72
  %v332 = vunpack.c.h.b16 %v72
  %v333 = vunpack.c.l.b16 %v73
  %v334 = vunpack.c.h.b16 %v73
  %v335 = vunpack.c.l.b16 %v74
  %v336 = vunpack.c.h.b16 %v74
  %v337 = vunpack.c.l.b16 %v75
  %v338 = vunpack.c.h.b16 %v75
  %v339 = vunpack.c.l.b16 %v76
  %v340 = vunpack.c.h.b16 %v76
  %v341 = vunpack.c.l.b16 %v77
  %v342 = vunpack.c.h.b16 %v77
  %v343 = vunpack.c.l.b16 %v78
  %v344 = vunpack.c.h.b16 %v78
  %v345 = vunpack.c.l.b16 %v79
  %v346 = vunpack.c.h.b16 %v79
  %v347 = vunpack.c.l.b16 %v80
  %v348 = vunpack.c.h.b16 %v80
  %v349 = vunpack.c.l.b16 %v81
  %v350 = vunpack.c.h.b16 %v81
  %v351 = vunpack.c.l.b16 %v82
  %v352 = vunpack.c.h.b16 %v82
  %v353 = vunpack.c.l.b16 %v83
  %v354 = vunpack.c.h.b16 %v83
  %v355 = vunpack.c.l.b16 %v84
  %v356 = vunpack.c.h.b16 %v84
  %v357 = vunpack.c.l.b16 %v85
  %v358 = vunpack.c.h.b16 %v85
  %v359 = vunpack.c.l.b16 %v86
  %v360 = vunpack.c.h.b16 %v86
  %v361 = vunpack.c.l.b16 %v87
  %v362 = vunpack.c.h.b16 %v87
  %v363 = vunpack.c.l.b16 %v88
  %v364 = vunpack.c.h.b16 %v88
  %v365 = vunpack.c.l.b16 %v89
  %v366 = vunpack.c.h.b16 %v89
  %v367 = vunpack.c.l.b16 %v90
  %v368 = vunpack.c.h.b16 %v90
  %v369 = vunpack.c.l.b16 %v91
  %v370 = vunpack.c.h.b16 %v91
  %v371 = vunpack.c.l.b16 %v92
  %v372 = vunpack.c.h.b16 %v92
  %v373 = vunpack.c.l.b16 %v93
  %v374 = vunpack.c.h.b16 %v93
  %v375 = vunpack.c.l.b16 %v94
  %v376 = vunpack.c.h.b16 %v94
  %v377 = vunpack.c.l.b16 %v95
  %v378 = vunpack.c.h.b16 %v95
  %v379 = vunpack.c.l.b16 %v96
  %v380 = vunpack.c.h.b16 %v96
  %v381 = vunpack.c.l.b16 %v97
  %v382 = vunpack.c.h.b16 %v97
  %v383 = vunpack.c.l.b16 %v98
  %v384 = vunpack.c.h.b16 %v98
  %v385 = vunpack.c.l.b16 %v99
  %v386 = vunpack.c.h.b16 %v99
  %v387 = vunpack.c.l.b16 %v100
  %v388 = vunpack.c.h.b16 %v100
  %v389 = vunpack.c.l.b16 %v101
  %v390 = vunpack.c.h.b16 %v101
  %v391 = vunpack.c.l.b16 %v102
  %v392 = vunpack.c.h.b16 %v102
  %v393 = vunpack.c.l.b16 %v103
  %v394 = vunpack.c.h.b16 %v103
  %v395 = vunpack.c.l.b16 %v104
  %v396 = vunpack.c.h.b16 %v104
  %v397 = vunpack.c.l.b16 %v105
  %v398 = vunpack.c.h.b16 %v105
  %v399 = vunpack.c.l.b16 %v106
  %v400 = vunpack.c.h.b16 %v106
  %v401 = vpack.c.b16 %v277, %v273
  %v402 = vpack.c.b16 %v278, %v274
  %v403 = vpack.c.b16 %v279, %v275
  %v404 = vpack.c.b16 %v280, %v276
  %v405 = vpack.c.b16 %v285, %v281
  %v406 = vpack.c.b16 %v286, %v282
  %v407 = vpack.c.b16 %v287, %v283
  %v408 = vpack.c.b16 %v288, %v284
  %v409 = vpack.c.b16 %v293, %v289
  %v410 = vpack.c.b16 %v294, %v290
  %v411 = vpack.c.b16 %v295, %v291
  %v412 = vpack.c.b16 %v296, %v292
  %v413 = vpack.c.b16 %v301, %v297
  %v414 = vpack.c.b16 %v302, %v298
  %v415 = vpack.c.b16 %v303, %v299
  %v416 = vpack.c.b16 %v304, %v300
  %v417 = vpack.c.b16 %v309, %v305
  %v418 = vpack.c.b16 %v310, %v306
  %v419 = vpack.c.b16 %v311, %v307
  %v420 = vpack.c.b16 %v312, %v308
  %v421 = vpack.c.b16 %v317, %v313
  %v422 = vpack.c.b16 %v318, %v314
  %v423 = vpack.c.b16 %v319, %v315
  %v424 = vpack.c.b16 %v320, %v316
  %v425 = vpack.c.b16 %v325, %v321
  %v426 = vpack.c.b16 %v326, %v322
  %v427 = vpack.c.b16 %v327, %v323
  %v428 = vpack.c.b16 %v328, %v324
  %v429 = vpack.c.b16 %v333, %v329
  %v430 = vpack.c.b16 %v334, %v330
  %v431 = vpack.c.b16 %v335, %v331
  %v432 = vpack.c.b16 %v336, %v332
  %v433 = vpack.c.b16 %v341, %v337
  %v434 = vpack.c.b16 %v342, %v338
  %v435 = vpack.c.b16 %v343, %v339
  %v436 = vpack.c.b16 %v344, %v340
  %v437 = vpack.c.b16 %v349, %v345
  %v438 = vpack.c.b16 %v350, %v346
  %v439 = vpack.c.b16 %v351, %v347
  %v440 = vpack.c.b16 %v352, %v348
  %v441 = vpack.c.b16 %v357, %v353
  %v442 = vpack.c.b16 %v358, %v354
  %v443 = vpack.c.b16 %v359, %v355
  %v444 = vpack.c.b16 %v360, %v356
  %v445 = vpack.c.b16 %v365, %v361
  %v446 = vpack.c.b16 %v366, %v362
  %v447 = vpack.c.b16 %v367, %v363
  %v448 = vpack.c.b16 %v368, %v364
  %v449 = vpack.c.b16 %v373, %v369
  %v450 = vpack.c.b16 %v374, %v370
  %v451 = vpack.c.b16 %v375, %v371
  %v452 = vpack.c.b16 %v376, %v372
  %v453 = vpack.c.b16 %v381, %v377
  %v454 = vpack.c.b16 %v382, %v378
  %v455 = vpack.c.b16 %v383, %v379
  %v456 = vpack.c.b16 %v384, %v380
  %v457 = vpack.c.b16 %v389, %v385
  %v458 = vpack.c.b16 %v390, %v386
  %v459 = vpack.c.b16 %v391, %v387
  %v460 = vpack.c.b16 %v392, %v388
  %v461 = vpack.c.b16 %v397, %v393
  %v462 = vpack.c.b16 %v398, %v394
  %v463 = vpack.c.b16 %v399, %v395
  %v464 = vpack.c.b16 %v400, %v396
  %529 = vmatprep.subr.bf16.mxu0 %v402
  %530 = vmatpush1.bf16.msra.mxu0 %v401
  %531 = vmatprep.subr.bf16.mxu0 %v406
  %532 = vmatpush1.bf16.msra.mxu0 %v405
  %533 = vmatprep.subr.bf16.mxu0 %v410
  %534 = vmatpush1.bf16.msra.mxu0 %v409
  %535 = vmatprep.subr.bf16.mxu0 %v414
  %536 = vmatpush1.bf16.msra.mxu0 %v413
  %537 = vmatprep.subr.bf16.mxu0 %v418
  %538 = vmatpush1.bf16.msra.mxu0 %v417
  %539 = vmatprep.subr.bf16.mxu0 %v422
  %540 = vmatpush1.bf16.msra.mxu0 %v421
  %541 = vmatprep.subr.bf16.mxu0 %v426
  %542 = vmatpush1.bf16.msra.mxu0 %v425
  %543 = vmatprep.subr.bf16.mxu0 %v430
  %544 = vmatpush1.bf16.msra.mxu0 %v429
  %545 = vmatprep.subr.bf16.mxu0 %v434
  %546 = vmatpush1.bf16.msra.mxu0 %v433
  %547 = vmatprep.subr.bf16.mxu0 %v438
  %548 = vmatpush1.bf16.msra.mxu0 %v437
  %549 = vmatprep.subr.bf16.mxu0 %v442
  %550 = vmatpush1.bf16.msra.mxu0 %v441
  %551 = vmatprep.subr.bf16.mxu0 %v446
  %552 = vmatpush1.bf16.msra.mxu0 %v445
  %553 = vmatprep.subr.bf16.mxu0 %v450
  %554 = vmatpush1.bf16.msra.mxu0 %v449
  %555 = vmatprep.subr.bf16.mxu0 %v454
  %556 = vmatpush1.bf16.msra.mxu0 %v453
  %557 = vmatprep.subr.bf16.mxu0 %v458
  %558 = vmatpush1.bf16.msra.mxu0 %v457
  %559 = vmatprep.subr.bf16.mxu0 %v462
  %560 = vmatpush1.bf16.msra.mxu0 %v461
  %561 = vmatprep.mubr.bf16.mxu0 %v178
  %562 = vmatmul.mubr.bf16.gmra.mrb[0].mxu0 %v177
  %v563 = vpop.f32.mrb[0].mxu0
  %v564 = vadd.f32 %v112, %v563
  %v565 = vpop.f32.mrb[0].mxu0
  %v566 = vadd.f32 %v116, %v565
  %v567 = vpop.f32.mrb[0].mxu0
  %v568 = vadd.f32 %v112, %v567
  %v569 = vpop.f32.mrb[0].mxu0
  %v570 = vadd.f32 %v116, %v569
  %571 = vmatprep.mubr.bf16.mxu0 %v180
  %572 = vmatmul.mubr.bf16.gmra.mrb[0].mxu0 %v179
  %v573 = vpop.f32.mrb[0].mxu0
  %v574 = vadd.f32 %v112, %v573
  %v575 = vpop.f32.mrb[0].mxu0
  %v576 = vadd.f32 %v116, %v575
  %v577 = vpop.f32.mrb[0].mxu0
  %v578 = vadd.f32 %v112, %v577
  %v579 = vpop.f32.mrb[0].mxu0
  %v580 = vadd.f32 %v116, %v579
  %581 = vmatprep.mubr.bf16.mxu0 %v182
  %582 = vmatmul.mubr.bf16.gmra.mrb[0].mxu0 %v181
  %v583 = vpop.f32.mrb[0].mxu0
  %v584 = vadd.f32 %v112, %v583
  %v585 = vpop.f32.mrb[0].mxu0
  %v586 = vadd.f32 %v116, %v585
  %v587 = vpop.f32.mrb[0].mxu0
  %v588 = vadd.f32 %v112, %v587
  %v589 = vpop.f32.mrb[0].mxu0
  %v590 = vadd.f32 %v116, %v589
  %591 = vmatprep.mubr.bf16.mxu0 %v184
  %592 = vmatmul.mubr.bf16.gmra.mrb[0].mxu0 %v183
  %v593 = vpop.f32.mrb[0].mxu0
  %v594 = vadd.f32 %v112, %v593
  %v595 = vpop.f32.mrb[0].mxu0
  %v596 = vadd.f32 %v116, %v595
  %v597 = vpop.f32.mrb[0].mxu0
  %v598 = vadd.f32 %v112, %v597
  %v599 = vpop.f32.mrb[0].mxu0
  %v600 = vadd.f32 %v116, %v599
  %601 = vmatprep.mubr.bf16.mxu0 %v186
  %602 = vmatmul.mubr.bf16.gmra.mrb[0].mxu0 %v185
  %v603 = vpop.f32.mrb[0].mxu0
  %v604 = vadd.f32 %v112, %v603
  %v605 = vpop.f32.mrb[0].mxu0
  %v606 = vadd.f32 %v116, %v605
  %v607 = vpop.f32.mrb[0].mxu0
  %v608 = vadd.f32 %v112, %v607
  %v609 = vpop.f32.mrb[0].mxu0
  %v610 = vadd.f32 %v116, %v609
  %611 = vmatprep.mubr.bf16.mxu0 %v188
  %612 = vmatmul.mubr.bf16.gmra.mrb[0].mxu0 %v187
  %v613 = vpop.f32.mrb[0].mxu0
  %v614 = vadd.f32 %v112, %v613
  %v615 = vpop.f32.mrb[0].mxu0
  %v616 = vadd.f32 %v116, %v615
  %v617 = vpop.f32.mrb[0].mxu0
  %v618 = vadd.f32 %v112, %v617
  %v619 = vpop.f32.mrb[0].mxu0
  %v620 = vadd.f32 %v116, %v619
  %621 = vmatprep.mubr.bf16.mxu0 %v190
  %622 = vmatmul.mubr.bf16.gmra.mrb[0].mxu0 %v189
  %v623 = vpop.f32.mrb[0].mxu0
  %v624 = vadd.f32 %v112, %v623
  %v625 = vpop.f32.mrb[0].mxu0
  %v626 = vadd.f32 %v116, %v625
  %v627 = vpop.f32.mrb[0].mxu0
  %v628 = vadd.f32 %v112, %v627
  %v629 = vpop.f32.mrb[0].mxu0
  %v630 = vadd.f32 %v116, %v629
  %631 = vmatprep.mubr.bf16.mxu0 %v192
  %632 = vmatmul.mubr.bf16.gmra.mrb[0].mxu0 %v191
  %v633 = vpop.f32.mrb[0].mxu0
  %v634 = vadd.f32 %v112, %v633
  %v635 = vpop.f32.mrb[0].mxu0
  %v636 = vadd.f32 %v116, %v635
  %v637 = vpop.f32.mrb[0].mxu0
  %v638 = vadd.f32 %v112, %v637
  %v639 = vpop.f32.mrb[0].mxu0
  %v640 = vadd.f32 %v116, %v639
  %641 = vdwg.mxu0
  %642 = vmatprep.subr.bf16.mxu0 %v404
  %643 = vmatpush1.bf16.msra.mxu0 %v403
  %644 = vmatprep.subr.bf16.mxu0 %v408
  %645 = vmatpush1.bf16.msra.mxu0 %v407
  %646 = vmatprep.subr.bf16.mxu0 %v412
  %647 = vmatpush1.bf16.msra.mxu0 %v411
  %648 = vmatprep.subr.bf16.mxu0 %v416
  %649 = vmatpush1.bf16.msra.mxu0 %v415
  %650 = vmatprep.subr.bf16.mxu0 %v420
  %651 = vmatpush1.bf16.msra.mxu0 %v419
  %652 = vmatprep.subr.bf16.mxu0 %v424
  %653 = vmatpush1.bf16.msra.mxu0 %v423
  %654 = vmatprep.subr.bf16.mxu0 %v428
  %655 = vmatpush1.bf16.msra.mxu0 %v427
  %656 = vmatprep.subr.bf16.mxu0 %v432
  %657 = vmatpush1.bf16.msra.mxu0 %v431
  %658 = vmatprep.subr.bf16.mxu0 %v436
  %659 = vmatpush1.bf16.msra.mxu0 %v435
  %660 = vmatprep.subr.bf16.mxu0 %v440
  %661 = vmatpush1.bf16.msra.mxu0 %v439
  %662 = vmatprep.subr.bf16.mxu0 %v444
  %663 = vmatpush1.bf16.msra.mxu0 %v443
  %664 = vmatprep.subr.bf16.mxu0 %v448
  %665 = vmatpush1.bf16.msra.mxu0 %v447
  %666 = vmatprep.subr.bf16.mxu0 %v452
  %667 = vmatpush1.bf16.msra.mxu0 %v451
  %668 = vmatprep.subr.bf16.mxu0 %v456
  %669 = vmatpush1.bf16.msra.mxu0 %v455
  %670 = vmatprep.subr.bf16.mxu0 %v460
  %671 = vmatpush1.bf16.msra.mxu0 %v459
  %672 = vmatprep.subr.bf16.mxu0 %v464
  %673 = vmatpush1.bf16.msra.mxu0 %v463
  %674 = vmatprep.mubr.bf16.mxu0 %v178
  %675 = vmatmul.mubr.bf16.gmra.mrb[0].mxu0 %v177
  %v676 = vpop.f32.mrb[0].mxu0
  %v677 = vadd.f32 %v120, %v676
  %v678 = vpop.f32.mrb[0].mxu0
  %v679 = vadd.f32 %v124, %v678
  %v680 = vpop.f32.mrb[0].mxu0
  %v681 = vadd.f32 %v120, %v680
  %v682 = vpop.f32.mrb[0].mxu0
  %v683 = vadd.f32 %v124, %v682
  %684 = vmatprep.mubr.bf16.mxu0 %v180
  %685 = vmatmul.mubr.bf16.gmra.mrb[0].mxu0 %v179
  %v686 = vpop.f32.mrb[0].mxu0
  %v687 = vadd.f32 %v120, %v686
  %v688 = vpop.f32.mrb[0].mxu0
  %v689 = vadd.f32 %v124, %v688
  %v690 = vpop.f32.mrb[0].mxu0
  %v691 = vadd.f32 %v120, %v690
  %v692 = vpop.f32.mrb[0].mxu0
  %v693 = vadd.f32 %v124, %v692
  %694 = vmatprep.mubr.bf16.mxu0 %v182
  %695 = vmatmul.mubr.bf16.gmra.mrb[0].mxu0 %v181
  %v696 = vpop.f32.mrb[0].mxu0
  %v697 = vadd.f32 %v120, %v696
  %v698 = vpop.f32.mrb[0].mxu0
  %v699 = vadd.f32 %v124, %v698
  %v700 = vpop.f32.mrb[0].mxu0
  %v701 = vadd.f32 %v120, %v700
  %v702 = vpop.f32.mrb[0].mxu0
  %v703 = vadd.f32 %v124, %v702
  %704 = vmatprep.mubr.bf16.mxu0 %v184
  %705 = vmatmul.mubr.bf16.gmra.mrb[0].mxu0 %v183
  %v706 = vpop.f32.mrb[0].mxu0
  %v707 = vadd.f32 %v120, %v706
  %v708 = vpop.f32.mrb[0].mxu0
  %v709 = vadd.f32 %v124, %v708
  %v710 = vpop.f32.mrb[0].mxu0
  %v711 = vadd.f32 %v120, %v710
  %v712 = vpop.f32.mrb[0].mxu0
  %v713 = vadd.f32 %v124, %v712
  %714 = vmatprep.mubr.bf16.mxu0 %v186
  %715 = vmatmul.mubr.bf16.gmra.mrb[0].mxu0 %v185
  %v716 = vpop.f32.mrb[0].mxu0
  %v717 = vadd.f32 %v120, %v716
  %v718 = vpop.f32.mrb[0].mxu0
  %v719 = vadd.f32 %v124, %v718
  %v720 = vpop.f32.mrb[0].mxu0
  %v721 = vadd.f32 %v120, %v720
  %v722 = vpop.f32.mrb[0].mxu0
  %v723 = vadd.f32 %v124, %v722
  %724 = vmatprep.mubr.bf16.mxu0 %v188
  %725 = vmatmul.mubr.bf16.gmra.mrb[0].mxu0 %v187
  %v726 = vpop.f32.mrb[0].mxu0
  %v727 = vadd.f32 %v120, %v726
  %v728 = vpop.f32.mrb[0].mxu0
  %v729 = vadd.f32 %v124, %v728
  %v730 = vpop.f32.mrb[0].mxu0
  %v731 = vadd.f32 %v120, %v730
  %v732 = vpop.f32.mrb[0].mxu0
  %v733 = vadd.f32 %v124, %v732
  %734 = vmatprep.mubr.bf16.mxu0 %v190
  %735 = vmatmul.mubr.bf16.gmra.mrb[0].mxu0 %v189
  %v736 = vpop.f32.mrb[0].mxu0
  %v737 = vadd.f32 %v120, %v736
  %v738 = vpop.f32.mrb[0].mxu0
  %v739 = vadd.f32 %v124, %v738
  %v740 = vpop.f32.mrb[0].mxu0
  %v741 = vadd.f32 %v120, %v740
  %v742 = vpop.f32.mrb[0].mxu0
  %v743 = vadd.f32 %v124, %v742
  %744 = vmatprep.mubr.bf16.mxu0 %v192
  %745 = vmatmul.mubr.bf16.gmra.mrb[0].mxu0 %v191
  %v746 = vpop.f32.mrb[0].mxu0
  %v747 = vadd.f32 %v120, %v746
  %v748 = vpop.f32.mrb[0].mxu0
  %v749 = vadd.f32 %v124, %v748
  %v750 = vpop.f32.mrb[0].mxu0
  %v751 = vadd.f32 %v120, %v750
  %v752 = vpop.f32.mrb[0].mxu0
  %v753 = vadd.f32 %v124, %v752
  %754 = vdwg.mxu0
  %vm755 = vcmp.gt.f32.partialorder %v564, 0.0
  %vm756 = vcmp.gt.f32.partialorder %v566, 0.0
  %vm757 = vcmp.gt.f32.partialorder %v677, 0.0
  %vm758 = vcmp.gt.f32.partialorder %v679, 0.0
  %vm759 = vcmp.gt.f32.partialorder %v568, 0.0
  %vm760 = vcmp.gt.f32.partialorder %v570, 0.0
  %vm761 = vcmp.gt.f32.partialorder %v681, 0.0
  %vm762 = vcmp.gt.f32.partialorder %v683, 0.0
  %vm763 = vcmp.gt.f32.partialorder %v574, 0.0
  %vm764 = vcmp.gt.f32.partialorder %v576, 0.0
  %vm765 = vcmp.gt.f32.partialorder %v687, 0.0
  %vm766 = vcmp.gt.f32.partialorder %v689, 0.0
  %vm767 = vcmp.gt.f32.partialorder %v578, 0.0
  %vm768 = vcmp.gt.f32.partialorder %v580, 0.0
  %vm769 = vcmp.gt.f32.partialorder %v691, 0.0
  %vm770 = vcmp.gt.f32.partialorder %v693, 0.0
  %vm771 = vcmp.gt.f32.partialorder %v584, 0.0
  %vm772 = vcmp.gt.f32.partialorder %v586, 0.0
  %vm773 = vcmp.gt.f32.partialorder %v697, 0.0
  %vm774 = vcmp.gt.f32.partialorder %v699, 0.0
  %vm775 = vcmp.gt.f32.partialorder %v588, 0.0
  %vm776 = vcmp.gt.f32.partialorder %v590, 0.0
  %vm777 = vcmp.gt.f32.partialorder %v701, 0.0
  %vm778 = vcmp.gt.f32.partialorder %v703, 0.0
  %vm779 = vcmp.gt.f32.partialorder %v594, 0.0
  %vm780 = vcmp.gt.f32.partialorder %v596, 0.0
  %vm781 = vcmp.gt.f32.partialorder %v707, 0.0
  %vm782 = vcmp.gt.f32.partialorder %v709, 0.0
  %vm783 = vcmp.gt.f32.partialorder %v598, 0.0
  %vm784 = vcmp.gt.f32.partialorder %v600, 0.0
  %vm785 = vcmp.gt.f32.partialorder %v711, 0.0
  %vm786 = vcmp.gt.f32.partialorder %v713, 0.0
  %vm787 = vcmp.gt.f32.partialorder %v604, 0.0
  %vm788 = vcmp.gt.f32.partialorder %v606, 0.0
  %vm789 = vcmp.gt.f32.partialorder %v717, 0.0
  %vm790 = vcmp.gt.f32.partialorder %v719, 0.0
  %vm791 = vcmp.gt.f32.partialorder %v608, 0.0
  %vm792 = vcmp.gt.f32.partialorder %v610, 0.0
  %vm793 = vcmp.gt.f32.partialorder %v721, 0.0
  %vm794 = vcmp.gt.f32.partialorder %v723, 0.0
  %vm795 = vcmp.gt.f32.partialorder %v614, 0.0
  %vm796 = vcmp.gt.f32.partialorder %v616, 0.0
  %vm797 = vcmp.gt.f32.partialorder %v727, 0.0
  %vm798 = vcmp.gt.f32.partialorder %v729, 0.0
  %vm799 = vcmp.gt.f32.partialorder %v618, 0.0
  %vm800 = vcmp.gt.f32.partialorder %v620, 0.0
  %vm801 = vcmp.gt.f32.partialorder %v731, 0.0
  %vm802 = vcmp.gt.f32.partialorder %v733, 0.0
  %vm803 = vcmp.gt.f32.partialorder %v624, 0.0
  %vm804 = vcmp.gt.f32.partialorder %v626, 0.0
  %vm805 = vcmp.gt.f32.partialorder %v737, 0.0
  %vm806 = vcmp.gt.f32.partialorder %v739, 0.0
  %vm807 = vcmp.gt.f32.partialorder %v628, 0.0
  %vm808 = vcmp.gt.f32.partialorder %v630, 0.0
  %vm809 = vcmp.gt.f32.partialorder %v741, 0.0
  %vm810 = vcmp.gt.f32.partialorder %v743, 0.0
  %vm811 = vcmp.gt.f32.partialorder %v634, 0.0
  %vm812 = vcmp.gt.f32.partialorder %v636, 0.0
  %vm813 = vcmp.gt.f32.partialorder %v747, 0.0
  %vm814 = vcmp.gt.f32.partialorder %v749, 0.0
  %vm815 = vcmp.gt.f32.partialorder %v638, 0.0
  %vm816 = vcmp.gt.f32.partialorder %v640, 0.0
  %vm817 = vcmp.gt.f32.partialorder %v751, 0.0
  %vm818 = vcmp.gt.f32.partialorder %v753, 0.0
  %v819 = vmul.f32 %v564, 0.2
  %v820 = vmul.f32 %v566, 0.2
  %v821 = vmul.f32 %v677, 0.2
  %v822 = vmul.f32 %v679, 0.2
  %v823 = vmul.f32 %v568, 0.2
  %v824 = vmul.f32 %v570, 0.2
  %v825 = vmul.f32 %v681, 0.2
  %v826 = vmul.f32 %v683, 0.2
  %v827 = vmul.f32 %v574, 0.2
  %v828 = vmul.f32 %v576, 0.2
  %v829 = vmul.f32 %v687, 0.2
  %v830 = vmul.f32 %v689, 0.2
  %v831 = vmul.f32 %v578, 0.2
  %v832 = vmul.f32 %v580, 0.2
  %v833 = vmul.f32 %v691, 0.2
  %v834 = vmul.f32 %v693, 0.2
  %v835 = vmul.f32 %v584, 0.2
  %v836 = vmul.f32 %v586, 0.2
  %v837 = vmul.f32 %v697, 0.2
  %v838 = vmul.f32 %v699, 0.2
  %v839 = vmul.f32 %v588, 0.2
  %v840 = vmul.f32 %v590, 0.2
  %v841 = vmul.f32 %v701, 0.2
  %v842 = vmul.f32 %v703, 0.2
  %v843 = vmul.f32 %v594, 0.2
  %v844 = vmul.f32 %v596, 0.2
  %v845 = vmul.f32 %v707, 0.2
  %v846 = vmul.f32 %v709, 0.2
  %v847 = vmul.f32 %v598, 0.2
  %v848 = vmul.f32 %v600, 0.2
  %v849 = vmul.f32 %v711, 0.2
  %v850 = vmul.f32 %v713, 0.2
  %v851 = vmul.f32 %v604, 0.2
  %v852 = vmul.f32 %v606, 0.2
  %v853 = vmul.f32 %v717, 0.2
  %v854 = vmul.f32 %v719, 0.2
  %v855 = vmul.f32 %v608, 0.2
  %v856 = vmul.f32 %v610, 0.2
  %v857 = vmul.f32 %v721, 0.2
  %v858 = vmul.f32 %v723, 0.2
  %v859 = vmul.f32 %v614, 0.2
  %v860 = vmul.f32 %v616, 0.2
  %v861 = vmul.f32 %v727, 0.2
  %v862 = vmul.f32 %v729, 0.2
  %v863 = vmul.f32 %v618, 0.2
  %v864 = vmul.f32 %v620, 0.2
  %v865 = vmul.f32 %v731, 0.2
  %v866 = vmul.f32 %v733, 0.2
  %v867 = vmul.f32 %v624, 0.2
  %v868 = vmul.f32 %v626, 0.2
  %v869 = vmul.f32 %v737, 0.2
  %v870 = vmul.f32 %v739, 0.2
  %v871 = vmul.f32 %v628, 0.2
  %v872 = vmul.f32 %v630, 0.2
  %v873 = vmul.f32 %v741, 0.2
  %v874 = vmul.f32 %v743, 0.2
  %v875 = vmul.f32 %v634, 0.2
  %v876 = vmul.f32 %v636, 0.2
  %v877 = vmul.f32 %v747, 0.2
  %v878 = vmul.f32 %v749, 0.2
  %v879 = vmul.f32 %v638, 0.2
  %v880 = vmul.f32 %v640, 0.2
  %v881 = vmul.f32 %v751, 0.2
  %v882 = vmul.f32 %v753, 0.2
  %v883 = vsel %vm755, %v564, %v819
  %v884 = vsel %vm756, %v566, %v820
  %v885 = vsel %vm757, %v677, %v821
  %v886 = vsel %vm758, %v679, %v822
  %v887 = vsel %vm759, %v568, %v823
  %v888 = vsel %vm760, %v570, %v824
  %v889 = vsel %vm761, %v681, %v825
  %v890 = vsel %vm762, %v683, %v826
  %v891 = vsel %vm763, %v574, %v827
  %v892 = vsel %vm764, %v576, %v828
  %v893 = vsel %vm765, %v687, %v829
  %v894 = vsel %vm766, %v689, %v830
  %v895 = vsel %vm767, %v578, %v831
  %v896 = vsel %vm768, %v580, %v832
  %v897 = vsel %vm769, %v691, %v833
  %v898 = vsel %vm770, %v693, %v834
  %v899 = vsel %vm771, %v584, %v835
  %v900 = vsel %vm772, %v586, %v836
  %v901 = vsel %vm773, %v697, %v837
  %v902 = vsel %vm774, %v699, %v838
  %v903 = vsel %vm775, %v588, %v839
  %v904 = vsel %vm776, %v590, %v840
  %v905 = vsel %vm777, %v701, %v841
  %v906 = vsel %vm778, %v703, %v842
  %v907 = vsel %vm779, %v594, %v843
  %v908 = vsel %vm780, %v596, %v844
  %v909 = vsel %vm781, %v707, %v845
  %v910 = vsel %vm782, %v709, %v846
  %v911 = vsel %vm783, %v598, %v847
  %v912 = vsel %vm784, %v600, %v848
  %v913 = vsel %vm785, %v711, %v849
  %v914 = vsel %vm786, %v713, %v850
  %v915 = vsel %vm787, %v604, %v851
  %v916 = vsel %vm788, %v606, %v852
  %v917 = vsel %vm789, %v717, %v853
  %v918 = vsel %vm790, %v719, %v854
  %v919 = vsel %vm791, %v608, %v855
  %v920 = vsel %vm792, %v610, %v856
  %v921 = vsel %vm793, %v721, %v857
  %v922 = vsel %vm794, %v723, %v858
  %v923 = vsel %vm795, %v614, %v859
  %v924 = vsel %vm796, %v616, %v860
  %v925 = vsel %vm797, %v727, %v861
  %v926 = vsel %vm798, %v729, %v862
  %v927 = vsel %vm799, %v618, %v863
  %v928 = vsel %vm800, %v620, %v864
  %v929 = vsel %vm801, %v731, %v865
  %v930 = vsel %vm802, %v733, %v866
  %v931 = vsel %vm803, %v624, %v867
  %v932 = vsel %vm804, %v626, %v868
  %v933 = vsel %vm805, %v737, %v869
  %v934 = vsel %vm806, %v739, %v870
  %v935 = vsel %vm807, %v628, %v871
  %v936 = vsel %vm808, %v630, %v872
  %v937 = vsel %vm809, %v741, %v873
  %v938 = vsel %vm810, %v743, %v874
  %v939 = vsel %vm811, %v634, %v875
  %v940 = vsel %vm812, %v636, %v876
  %v941 = vsel %vm813, %v747, %v877
  %v942 = vsel %vm814, %v749, %v878
  %v943 = vsel %vm815, %v638, %v879
  %v944 = vsel %vm816, %v640, %v880
  %v945 = vsel %vm817, %v751, %v881
  %v946 = vsel %vm818, %v753, %v882
  %v947 = vpack.c.bf16 %v887, %v883
  %v948 = vpack.c.bf16 %v888, %v884
  %v949 = vpack.c.bf16 %v889, %v885
  %v950 = vpack.c.bf16 %v890, %v886
  %v951 = vpack.c.bf16 %v895, %v891
  %v952 = vpack.c.bf16 %v896, %v892
  %v953 = vpack.c.bf16 %v897, %v893
  %v954 = vpack.c.bf16 %v898, %v894
  %v955 = vpack.c.bf16 %v903, %v899
  %v956 = vpack.c.bf16 %v904, %v900
  %v957 = vpack.c.bf16 %v905, %v901
  %v958 = vpack.c.bf16 %v906, %v902
  %v959 = vpack.c.bf16 %v911, %v907
  %v960 = vpack.c.bf16 %v912, %v908
  %v961 = vpack.c.bf16 %v913, %v909
  %v962 = vpack.c.bf16 %v914, %v910
  %v963 = vpack.c.bf16 %v919, %v915
  %v964 = vpack.c.bf16 %v920, %v916
  %v965 = vpack.c.bf16 %v921, %v917
  %v966 = vpack.c.bf16 %v922, %v918
  %v967 = vpack.c.bf16 %v927, %v923
  %v968 = vpack.c.bf16 %v928, %v924
  %v969 = vpack.c.bf16 %v929, %v925
  %v970 = vpack.c.bf16 %v930, %v926
  %v971 = vpack.c.bf16 %v935, %v931
  %v972 = vpack.c.bf16 %v936, %v932
  %v973 = vpack.c.bf16 %v937, %v933
  %v974 = vpack.c.bf16 %v938, %v934
  %v975 = vpack.c.bf16 %v943, %v939
  %v976 = vpack.c.bf16 %v944, %v940
  %v977 = vpack.c.bf16 %v945, %v941
  %v978 = vpack.c.bf16 %v946, %v942
  %v979 = vld [vmem:[%s3] sm:$0xff]
  %v980 = vld [vmem:[%s3 + $0x8] sm:$0xff]
  %v981 = vld [vmem:[%s3 + $0x10] sm:$0xff]
  %v982 = vld [vmem:[%s3 + $0x18] sm:$0xff]
  %v983 = vld [vmem:[%s3 + $0x20] sm:$0xff]
  %v984 = vld [vmem:[%s3 + $0x28] sm:$0xff]
  %v985 = vld [vmem:[%s3 + $0x30] sm:$0xff]
  %v986 = vld [vmem:[%s3 + $0x38] sm:$0xff]
  %v987 = vld [vmem:[%s3 + $0x40] sm:$0xff]
  %v988 = vld [vmem:[%s3 + $0x48] sm:$0xff]
  %v989 = vld [vmem:[%s3 + $0x50] sm:$0xff]
  %v990 = vld [vmem:[%s3 + $0x58] sm:$0xff]
  %v991 = vld [vmem:[%s3 + $0x60] sm:$0xff]
  %v992 = vld [vmem:[%s3 + $0x68] sm:$0xff]
  %v993 = vld [vmem:[%s3 + $0x70] sm:$0xff]
  %v994 = vld [vmem:[%s3 + $0x78] sm:$0xff]
  %v995 = vld [vmem:[%s3 + $0x80] sm:$0xff]
  %v996 = vld [vmem:[%s3 + $0x88] sm:$0xff]
  %v997 = vld [vmem:[%s3 + $0x90] sm:$0xff]
  %v998 = vld [vmem:[%s3 + $0x98] sm:$0xff]
  %v999 = vld [vmem:[%s3 + $0xa0] sm:$0xff]
  %v1000 = vld [vmem:[%s3 + $0xa8] sm:$0xff]
  %v1001 = vld [vmem:[%s3 + $0xb0] sm:$0xff]
  %v1002 = vld [vmem:[%s3 + $0xb8] sm:$0xff]
  %v1003 = vld [vmem:[%s3 + $0xc0] sm:$0xff]
  %v1004 = vld [vmem:[%s3 + $0xc8] sm:$0xff]
  %v1005 = vld [vmem:[%s3 + $0xd0] sm:$0xff]
  %v1006 = vld [vmem:[%s3 + $0xd8] sm:$0xff]
  %v1007 = vld [vmem:[%s3 + $0xe0] sm:$0xff]
  %v1008 = vld [vmem:[%s3 + $0xe8] sm:$0xff]
  %v1009 = vld [vmem:[%s3 + $0xf0] sm:$0xff]
  %v1010 = vld [vmem:[%s3 + $0xf8] sm:$0xff]
  %v1011 = vld [vmem:[%s3 + $0x100] sm:$0xff]
  %v1012 = vld [vmem:[%s3 + $0x108] sm:$0xff]
  %v1013 = vld [vmem:[%s3 + $0x110] sm:$0xff]
  %v1014 = vld [vmem:[%s3 + $0x118] sm:$0xff]
  %v1015 = vld [vmem:[%s3 + $0x120] sm:$0xff]
  %v1016 = vld [vmem:[%s3 + $0x128] sm:$0xff]
  %v1017 = vld [vmem:[%s3 + $0x130] sm:$0xff]
  %v1018 = vld [vmem:[%s3 + $0x138] sm:$0xff]
  %v1019 = vld [vmem:[%s3 + $0x140] sm:$0xff]
  %v1020 = vld [vmem:[%s3 + $0x148] sm:$0xff]
  %v1021 = vld [vmem:[%s3 + $0x150] sm:$0xff]
  %v1022 = vld [vmem:[%s3 + $0x158] sm:$0xff]
  %v1023 = vld [vmem:[%s3 + $0x160] sm:$0xff]
  %v1024 = vld [vmem:[%s3 + $0x168] sm:$0xff]
  %v1025 = vld [vmem:[%s3 + $0x170] sm:$0xff]
  %v1026 = vld [vmem:[%s3 + $0x178] sm:$0xff]
  %v1027 = vld [vmem:[%s3 + $0x180] sm:$0xff]
  %v1028 = vld [vmem:[%s3 + $0x188] sm:$0xff]
  %v1029 = vld [vmem:[%s3 + $0x190] sm:$0xff]
  %v1030 = vld [vmem:[%s3 + $0x198] sm:$0xff]
  %v1031 = vld [vmem:[%s3 + $0x1a0] sm:$0xff]
  %v1032 = vld [vmem:[%s3 + $0x1a8] sm:$0xff]
  %v1033 = vld [vmem:[%s3 + $0x1b0] sm:$0xff]
  %v1034 = vld [vmem:[%s3 + $0x1b8] sm:$0xff]
  %v1035 = vld [vmem:[%s3 + $0x1c0] sm:$0xff]
  %v1036 = vld [vmem:[%s3 + $0x1c8] sm:$0xff]
  %v1037 = vld [vmem:[%s3 + $0x1d0] sm:$0xff]
  %v1038 = vld [vmem:[%s3 + $0x1d8] sm:$0xff]
  %v1039 = vld [vmem:[%s3 + $0x1e0] sm:$0xff]
  %v1040 = vld [vmem:[%s3 + $0x1e8] sm:$0xff]
  %v1041 = vld [vmem:[%s3 + $0x1f0] sm:$0xff]
  %v1042 = vld [vmem:[%s3 + $0x1f8] sm:$0xff]
  %v1043 = vld [vmem:[%s4] sm:$0x3]
  %v1045 = vlaneseq
  %v1046 = vshrl.u32 %v1045, 7
  %v1047 = vsub.s32 0, %v1046
  %v1048 = vrot.slane %v1043, %v1047
  %v1049 = vlaneseq
  %v1050 = vshrl.u32 %v1049, 7
  %v1051 = vsub.s32 1, %v1050
  %v1052 = vrot.slane %v1043, %v1051
  %v1119 = vunpack.c.l.b16 %v979
  %v1120 = vunpack.c.h.b16 %v979
  %v1121 = vunpack.c.l.b16 %v980
  %v1122 = vunpack.c.h.b16 %v980
  %v1123 = vunpack.c.l.b16 %v981
  %v1124 = vunpack.c.h.b16 %v981
  %v1125 = vunpack.c.l.b16 %v982
  %v1126 = vunpack.c.h.b16 %v982
  %v1127 = vunpack.c.l.b16 %v983
  %v1128 = vunpack.c.h.b16 %v983
  %v1129 = vunpack.c.l.b16 %v984
  %v1130 = vunpack.c.h.b16 %v984
  %v1131 = vunpack.c.l.b16 %v985
  %v1132 = vunpack.c.h.b16 %v985
  %v1133 = vunpack.c.l.b16 %v986
  %v1134 = vunpack.c.h.b16 %v986
  %v1135 = vunpack.c.l.b16 %v987
  %v1136 = vunpack.c.h.b16 %v987
  %v1137 = vunpack.c.l.b16 %v988
  %v1138 = vunpack.c.h.b16 %v988
  %v1139 = vunpack.c.l.b16 %v989
  %v1140 = vunpack.c.h.b16 %v989
  %v1141 = vunpack.c.l.b16 %v990
  %v1142 = vunpack.c.h.b16 %v990
  %v1143 = vunpack.c.l.b16 %v991
  %v1144 = vunpack.c.h.b16 %v991
  %v1145 = vunpack.c.l.b16 %v992
  %v1146 = vunpack.c.h.b16 %v992
  %v1147 = vunpack.c.l.b16 %v993
  %v1148 = vunpack.c.h.b16 %v993
  %v1149 = vunpack.c.l.b16 %v994
  %v1150 = vunpack.c.h.b16 %v994
  %v1151 = vunpack.c.l.b16 %v995
  %v1152 = vunpack.c.h.b16 %v995
  %v1153 = vunpack.c.l.b16 %v996
  %v1154 = vunpack.c.h.b16 %v996
  %v1155 = vunpack.c.l.b16 %v997
  %v1156 = vunpack.c.h.b16 %v997
  %v1157 = vunpack.c.l.b16 %v998
  %v1158 = vunpack.c.h.b16 %v998
  %v1159 = vunpack.c.l.b16 %v999
  %v1160 = vunpack.c.h.b16 %v999
  %v1161 = vunpack.c.l.b16 %v1000
  %v1162 = vunpack.c.h.b16 %v1000
  %v1163 = vunpack.c.l.b16 %v1001
  %v1164 = vunpack.c.h.b16 %v1001
  %v1165 = vunpack.c.l.b16 %v1002
  %v1166 = vunpack.c.h.b16 %v1002
  %v1167 = vunpack.c.l.b16 %v1003
  %v1168 = vunpack.c.h.b16 %v1003
  %v1169 = vunpack.c.l.b16 %v1004
  %v1170 = vunpack.c.h.b16 %v1004
  %v1171 = vunpack.c.l.b16 %v1005
  %v1172 = vunpack.c.h.b16 %v1005
  %v1173 = vunpack.c.l.b16 %v1006
  %v1174 = vunpack.c.h.b16 %v1006
  %v1175 = vunpack.c.l.b16 %v1007
  %v1176 = vunpack.c.h.b16 %v1007
  %v1177 = vunpack.c.l.b16 %v1008
  %v1178 = vunpack.c.h.b16 %v1008
  %v1179 = vunpack.c.l.b16 %v1009
  %v1180 = vunpack.c.h.b16 %v1009
  %v1181 = vunpack.c.l.b16 %v1010
  %v1182 = vunpack.c.h.b16 %v1010
  %v1183 = vunpack.c.l.b16 %v1011
  %v1184 = vunpack.c.h.b16 %v1011
  %v1185 = vunpack.c.l.b16 %v1012
  %v1186 = vunpack.c.h.b16 %v1012
  %v1187 = vunpack.c.l.b16 %v1013
  %v1188 = vunpack.c.h.b16 %v1013
  %v1189 = vunpack.c.l.b16 %v1014
  %v1190 = vunpack.c.h.b16 %v1014
  %v1191 = vunpack.c.l.b16 %v1015
  %v1192 = vunpack.c.h.b16 %v1015
  %v1193 = vunpack.c.l.b16 %v1016
  %v1194 = vunpack.c.h.b16 %v1016
  %v1195 = vunpack.c.l.b16 %v1017
  %v1196 = vunpack.c.h.b16 %v1017
  %v1197 = vunpack.c.l.b16 %v1018
  %v1198 = vunpack.c.h.b16 %v1018
  %v1199 = vunpack.c.l.b16 %v1019
  %v1200 = vunpack.c.h.b16 %v1019
  %v1201 = vunpack.c.l.b16 %v1020
  %v1202 = vunpack.c.h.b16 %v1020
  %v1203 = vunpack.c.l.b16 %v1021
  %v1204 = vunpack.c.h.b16 %v1021
  %v1205 = vunpack.c.l.b16 %v1022
  %v1206 = vunpack.c.h.b16 %v1022
  %v1207 = vunpack.c.l.b16 %v1023
  %v1208 = vunpack.c.h.b16 %v1023
  %v1209 = vunpack.c.l.b16 %v1024
  %v1210 = vunpack.c.h.b16 %v1024
  %v1211 = vunpack.c.l.b16 %v1025
  %v1212 = vunpack.c.h.b16 %v1025
  %v1213 = vunpack.c.l.b16 %v1026
  %v1214 = vunpack.c.h.b16 %v1026
  %v1215 = vunpack.c.l.b16 %v1027
  %v1216 = vunpack.c.h.b16 %v1027
  %v1217 = vunpack.c.l.b16 %v1028
  %v1218 = vunpack.c.h.b16 %v1028
  %v1219 = vunpack.c.l.b16 %v1029
  %v1220 = vunpack.c.h.b16 %v1029
  %v1221 = vunpack.c.l.b16 %v1030
  %v1222 = vunpack.c.h.b16 %v1030
  %v1223 = vunpack.c.l.b16 %v1031
  %v1224 = vunpack.c.h.b16 %v1031
  %v1225 = vunpack.c.l.b16 %v1032
  %v1226 = vunpack.c.h.b16 %v1032
  %v1227 = vunpack.c.l.b16 %v1033
  %v1228 = vunpack.c.h.b16 %v1033
  %v1229 = vunpack.c.l.b16 %v1034
  %v1230 = vunpack.c.h.b16 %v1034
  %v1231 = vunpack.c.l.b16 %v1035
  %v1232 = vunpack.c.h.b16 %v1035
  %v1233 = vunpack.c.l.b16 %v1036
  %v1234 = vunpack.c.h.b16 %v1036
  %v1235 = vunpack.c.l.b16 %v1037
  %v1236 = vunpack.c.h.b16 %v1037
  %v1237 = vunpack.c.l.b16 %v1038
  %v1238 = vunpack.c.h.b16 %v1038
  %v1239 = vunpack.c.l.b16 %v1039
  %v1240 = vunpack.c.h.b16 %v1039
  %v1241 = vunpack.c.l.b16 %v1040
  %v1242 = vunpack.c.h.b16 %v1040
  %v1243 = vunpack.c.l.b16 %v1041
  %v1244 = vunpack.c.h.b16 %v1041
  %v1245 = vunpack.c.l.b16 %v1042
  %v1246 = vunpack.c.h.b16 %v1042
  %v1247 = vpack.c.b16 %v1121, %v1119
  %v1248 = vpack.c.b16 %v1122, %v1120
  %v1249 = vpack.c.b16 %v1125, %v1123
  %v1250 = vpack.c.b16 %v1126, %v1124
  %v1251 = vpack.c.b16 %v1129, %v1127
  %v1252 = vpack.c.b16 %v1130, %v1128
  %v1253 = vpack.c.b16 %v1133, %v1131
  %v1254 = vpack.c.b16 %v1134, %v1132
  %v1255 = vpack.c.b16 %v1137, %v1135
  %v1256 = vpack.c.b16 %v1138, %v1136
  %v1257 = vpack.c.b16 %v1141, %v1139
  %v1258 = vpack.c.b16 %v1142, %v1140
  %v1259 = vpack.c.b16 %v1145, %v1143
  %v1260 = vpack.c.b16 %v1146, %v1144
  %v1261 = vpack.c.b16 %v1149, %v1147
  %v1262 = vpack.c.b16 %v1150, %v1148
  %v1263 = vpack.c.b16 %v1153, %v1151
  %v1264 = vpack.c.b16 %v1154, %v1152
  %v1265 = vpack.c.b16 %v1157, %v1155
  %v1266 = vpack.c.b16 %v1158, %v1156
  %v1267 = vpack.c.b16 %v1161, %v1159
  %v1268 = vpack.c.b16 %v1162, %v1160
  %v1269 = vpack.c.b16 %v1165, %v1163
  %v1270 = vpack.c.b16 %v1166, %v1164
  %v1271 = vpack.c.b16 %v1169, %v1167
  %v1272 = vpack.c.b16 %v1170, %v1168
  %v1273 = vpack.c.b16 %v1173, %v1171
  %v1274 = vpack.c.b16 %v1174, %v1172
  %v1275 = vpack.c.b16 %v1177, %v1175
  %v1276 = vpack.c.b16 %v1178, %v1176
  %v1277 = vpack.c.b16 %v1181, %v1179
  %v1278 = vpack.c.b16 %v1182, %v1180
  %v1279 = vpack.c.b16 %v1185, %v1183
  %v1280 = vpack.c.b16 %v1186, %v1184
  %v1281 = vpack.c.b16 %v1189, %v1187
  %v1282 = vpack.c.b16 %v1190, %v1188
  %v1283 = vpack.c.b16 %v1193, %v1191
  %v1284 = vpack.c.b16 %v1194, %v1192
  %v1285 = vpack.c.b16 %v1197, %v1195
  %v1286 = vpack.c.b16 %v1198, %v1196
  %v1287 = vpack.c.b16 %v1201, %v1199
  %v1288 = vpack.c.b16 %v1202, %v1200
  %v1289 = vpack.c.b16 %v1205, %v1203
  %v1290 = vpack.c.b16 %v1206, %v1204
  %v1291 = vpack.c.b16 %v1209, %v1207
  %v1292 = vpack.c.b16 %v1210, %v1208
  %v1293 = vpack.c.b16 %v1213, %v1211
  %v1294 = vpack.c.b16 %v1214, %v1212
  %v1295 = vpack.c.b16 %v1217, %v1215
  %v1296 = vpack.c.b16 %v1218, %v1216
  %v1297 = vpack.c.b16 %v1221, %v1219
  %v1298 = vpack.c.b16 %v1222, %v1220
  %v1299 = vpack.c.b16 %v1225, %v1223
  %v1300 = vpack.c.b16 %v1226, %v1224
  %v1301 = vpack.c.b16 %v1229, %v1227
  %v1302 = vpack.c.b16 %v1230, %v1228
  %v1303 = vpack.c.b16 %v1233, %v1231
  %v1304 = vpack.c.b16 %v1234, %v1232
  %v1305 = vpack.c.b16 %v1237, %v1235
  %v1306 = vpack.c.b16 %v1238, %v1236
  %v1307 = vpack.c.b16 %v1241, %v1239
  %v1308 = vpack.c.b16 %v1242, %v1240
  %v1309 = vpack.c.b16 %v1245, %v1243
  %v1310 = vpack.c.b16 %v1246, %v1244
  %1375 = vmatprep.subr.bf16.mxu0 %v1248
  %1376 = vmatpush1.bf16.msra.mxu0 %v1247
  %1377 = vmatprep.subr.bf16.mxu0 %v1250
  %1378 = vmatpush1.bf16.msra.mxu0 %v1249
  %1379 = vmatprep.subr.bf16.mxu0 %v1252
  %1380 = vmatpush1.bf16.msra.mxu0 %v1251
  %1381 = vmatprep.subr.bf16.mxu0 %v1254
  %1382 = vmatpush1.bf16.msra.mxu0 %v1253
  %1383 = vmatprep.subr.bf16.mxu0 %v1256
  %1384 = vmatpush1.bf16.msra.mxu0 %v1255
  %1385 = vmatprep.subr.bf16.mxu0 %v1258
  %1386 = vmatpush1.bf16.msra.mxu0 %v1257
  %1387 = vmatprep.subr.bf16.mxu0 %v1260
  %1388 = vmatpush1.bf16.msra.mxu0 %v1259
  %1389 = vmatprep.subr.bf16.mxu0 %v1262
  %1390 = vmatpush1.bf16.msra.mxu0 %v1261
  %1391 = vmatprep.subr.bf16.mxu0 %v1264
  %1392 = vmatpush1.bf16.msra.mxu0 %v1263
  %1393 = vmatprep.subr.bf16.mxu0 %v1266
  %1394 = vmatpush1.bf16.msra.mxu0 %v1265
  %1395 = vmatprep.subr.bf16.mxu0 %v1268
  %1396 = vmatpush1.bf16.msra.mxu0 %v1267
  %1397 = vmatprep.subr.bf16.mxu0 %v1270
  %1398 = vmatpush1.bf16.msra.mxu0 %v1269
  %1399 = vmatprep.subr.bf16.mxu0 %v1272
  %1400 = vmatpush1.bf16.msra.mxu0 %v1271
  %1401 = vmatprep.subr.bf16.mxu0 %v1274
  %1402 = vmatpush1.bf16.msra.mxu0 %v1273
  %1403 = vmatprep.subr.bf16.mxu0 %v1276
  %1404 = vmatpush1.bf16.msra.mxu0 %v1275
  %1405 = vmatprep.subr.bf16.mxu0 %v1278
  %1406 = vmatpush1.bf16.msra.mxu0 %v1277
  %1407 = vmatprep.mubr.bf16.mxu0 %v948
  %1408 = vmatmul.mubr.bf16.gmra.mrb[0].mxu0 %v947
  %v1409 = vpop.f32.mrb[0].mxu0
  %v1410 = vadd.f32 %v1048, %v1409
  %v1411 = vpop.f32.mrb[0].mxu0
  %v1412 = vadd.f32 %v1052, %v1411
  %v1413 = vpop.f32.mrb[0].mxu0
  %v1414 = vadd.f32 %v1048, %v1413
  %v1415 = vpop.f32.mrb[0].mxu0
  %v1416 = vadd.f32 %v1052, %v1415
  %1417 = vmatprep.mubr.bf16.mxu0 %v952
  %1418 = vmatmul.mubr.bf16.gmra.mrb[0].mxu0 %v951
  %v1419 = vpop.f32.mrb[0].mxu0
  %v1420 = vadd.f32 %v1048, %v1419
  %v1421 = vpop.f32.mrb[0].mxu0
  %v1422 = vadd.f32 %v1052, %v1421
  %v1423 = vpop.f32.mrb[0].mxu0
  %v1424 = vadd.f32 %v1048, %v1423
  %v1425 = vpop.f32.mrb[0].mxu0
  %v1426 = vadd.f32 %v1052, %v1425
  %1427 = vmatprep.mubr.bf16.mxu0 %v956
  %1428 = vmatmul.mubr.bf16.gmra.mrb[0].mxu0 %v955
  %v1429 = vpop.f32.mrb[0].mxu0
  %v1430 = vadd.f32 %v1048, %v1429
  %v1431 = vpop.f32.mrb[0].mxu0
  %v1432 = vadd.f32 %v1052, %v1431
  %v1433 = vpop.f32.mrb[0].mxu0
  %v1434 = vadd.f32 %v1048, %v1433
  %v1435 = vpop.f32.mrb[0].mxu0
  %v1436 = vadd.f32 %v1052, %v1435
  %1437 = vmatprep.mubr.bf16.mxu0 %v960
  %1438 = vmatmul.mubr.bf16.gmra.mrb[0].mxu0 %v959
  %v1439 = vpop.f32.mrb[0].mxu0
  %v1440 = vadd.f32 %v1048, %v1439
  %v1441 = vpop.f32.mrb[0].mxu0
  %v1442 = vadd.f32 %v1052, %v1441
  %v1443 = vpop.f32.mrb[0].mxu0
  %v1444 = vadd.f32 %v1048, %v1443
  %v1445 = vpop.f32.mrb[0].mxu0
  %v1446 = vadd.f32 %v1052, %v1445
  %1447 = vmatprep.mubr.bf16.mxu0 %v964
  %1448 = vmatmul.mubr.bf16.gmra.mrb[0].mxu0 %v963
  %v1449 = vpop.f32.mrb[0].mxu0
  %v1450 = vadd.f32 %v1048, %v1449
  %v1451 = vpop.f32.mrb[0].mxu0
  %v1452 = vadd.f32 %v1052, %v1451
  %v1453 = vpop.f32.mrb[0].mxu0
  %v1454 = vadd.f32 %v1048, %v1453
  %v1455 = vpop.f32.mrb[0].mxu0
  %v1456 = vadd.f32 %v1052, %v1455
  %1457 = vmatprep.mubr.bf16.mxu0 %v968
  %1458 = vmatmul.mubr.bf16.gmra.mrb[0].mxu0 %v967
  %v1459 = vpop.f32.mrb[0].mxu0
  %v1460 = vadd.f32 %v1048, %v1459
  %v1461 = vpop.f32.mrb[0].mxu0
  %v1462 = vadd.f32 %v1052, %v1461
  %v1463 = vpop.f32.mrb[0].mxu0
  %v1464 = vadd.f32 %v1048, %v1463
  %v1465 = vpop.f32.mrb[0].mxu0
  %v1466 = vadd.f32 %v1052, %v1465
  %1467 = vmatprep.mubr.bf16.mxu0 %v972
  %1468 = vmatmul.mubr.bf16.gmra.mrb[0].mxu0 %v971
  %v1469 = vpop.f32.mrb[0].mxu0
  %v1470 = vadd.f32 %v1048, %v1469
  %v1471 = vpop.f32.mrb[0].mxu0
  %v1472 = vadd.f32 %v1052, %v1471
  %v1473 = vpop.f32.mrb[0].mxu0
  %v1474 = vadd.f32 %v1048, %v1473
  %v1475 = vpop.f32.mrb[0].mxu0
  %v1476 = vadd.f32 %v1052, %v1475
  %1477 = vmatprep.mubr.bf16.mxu0 %v976
  %1478 = vmatmul.mubr.bf16.gmra.mrb[0].mxu0 %v975
  %v1479 = vpop.f32.mrb[0].mxu0
  %v1480 = vadd.f32 %v1048, %v1479
  %v1481 = vpop.f32.mrb[0].mxu0
  %v1482 = vadd.f32 %v1052, %v1481
  %v1483 = vpop.f32.mrb[0].mxu0
  %v1484 = vadd.f32 %v1048, %v1483
  %v1485 = vpop.f32.mrb[0].mxu0
  %v1486 = vadd.f32 %v1052, %v1485
  %1487 = vdwg.mxu0
  %1488 = vmatprep.subr.bf16.mxu0 %v1280
  %1489 = vmatpush1.bf16.msra.mxu0 %v1279
  %1490 = vmatprep.subr.bf16.mxu0 %v1282
  %1491 = vmatpush1.bf16.msra.mxu0 %v1281
  %1492 = vmatprep.subr.bf16.mxu0 %v1284
  %1493 = vmatpush1.bf16.msra.mxu0 %v1283
  %1494 = vmatprep.subr.bf16.mxu0 %v1286
  %1495 = vmatpush1.bf16.msra.mxu0 %v1285
  %1496 = vmatprep.subr.bf16.mxu0 %v1288
  %1497 = vmatpush1.bf16.msra.mxu0 %v1287
  %1498 = vmatprep.subr.bf16.mxu0 %v1290
  %1499 = vmatpush1.bf16.msra.mxu0 %v1289
  %1500 = vmatprep.subr.bf16.mxu0 %v1292
  %1501 = vmatpush1.bf16.msra.mxu0 %v1291
  %1502 = vmatprep.subr.bf16.mxu0 %v1294
  %1503 = vmatpush1.bf16.msra.mxu0 %v1293
  %1504 = vmatprep.subr.bf16.mxu0 %v1296
  %1505 = vmatpush1.bf16.msra.mxu0 %v1295
  %1506 = vmatprep.subr.bf16.mxu0 %v1298
  %1507 = vmatpush1.bf16.msra.mxu0 %v1297
  %1508 = vmatprep.subr.bf16.mxu0 %v1300
  %1509 = vmatpush1.bf16.msra.mxu0 %v1299
  %1510 = vmatprep.subr.bf16.mxu0 %v1302
  %1511 = vmatpush1.bf16.msra.mxu0 %v1301
  %1512 = vmatprep.subr.bf16.mxu0 %v1304
  %1513 = vmatpush1.bf16.msra.mxu0 %v1303
  %1514 = vmatprep.subr.bf16.mxu0 %v1306
  %1515 = vmatpush1.bf16.msra.mxu0 %v1305
  %1516 = vmatprep.subr.bf16.mxu0 %v1308
  %1517 = vmatpush1.bf16.msra.mxu0 %v1307
  %1518 = vmatprep.subr.bf16.mxu0 %v1310
  %1519 = vmatpush1.bf16.msra.mxu0 %v1309
  %1520 = vmatprep.mubr.bf16.mxu0 %v950
  %1521 = vmatmul.mubr.bf16.gmra.mrb[0].mxu0 %v949
  %v1522 = vpop.f32.mrb[0].mxu0
  %v1523 = vadd.f32 %v1410, %v1522
  %v1524 = vpop.f32.mrb[0].mxu0
  %v1525 = vadd.f32 %v1412, %v1524
  %v1526 = vpop.f32.mrb[0].mxu0
  %v1527 = vadd.f32 %v1414, %v1526
  %v1528 = vpop.f32.mrb[0].mxu0
  %v1529 = vadd.f32 %v1416, %v1528
  %1530 = vmatprep.mubr.bf16.mxu0 %v954
  %1531 = vmatmul.mubr.bf16.gmra.mrb[0].mxu0 %v953
  %v1532 = vpop.f32.mrb[0].mxu0
  %v1533 = vadd.f32 %v1420, %v1532
  %v1534 = vpop.f32.mrb[0].mxu0
  %v1535 = vadd.f32 %v1422, %v1534
  %v1536 = vpop.f32.mrb[0].mxu0
  %v1537 = vadd.f32 %v1424, %v1536
  %v1538 = vpop.f32.mrb[0].mxu0
  %v1539 = vadd.f32 %v1426, %v1538
  %1540 = vmatprep.mubr.bf16.mxu0 %v958
  %1541 = vmatmul.mubr.bf16.gmra.mrb[0].mxu0 %v957
  %v1542 = vpop.f32.mrb[0].mxu0
  %v1543 = vadd.f32 %v1430, %v1542
  %v1544 = vpop.f32.mrb[0].mxu0
  %v1545 = vadd.f32 %v1432, %v1544
  %v1546 = vpop.f32.mrb[0].mxu0
  %v1547 = vadd.f32 %v1434, %v1546
  %v1548 = vpop.f32.mrb[0].mxu0
  %v1549 = vadd.f32 %v1436, %v1548
  %1550 = vmatprep.mubr.bf16.mxu0 %v962
  %1551 = vmatmul.mubr.bf16.gmra.mrb[0].mxu0 %v961
  %v1552 = vpop.f32.mrb[0].mxu0
  %v1553 = vadd.f32 %v1440, %v1552
  %v1554 = vpop.f32.mrb[0].mxu0
  %v1555 = vadd.f32 %v1442, %v1554
  %v1556 = vpop.f32.mrb[0].mxu0
  %v1557 = vadd.f32 %v1444, %v1556
  %v1558 = vpop.f32.mrb[0].mxu0
  %v1559 = vadd.f32 %v1446, %v1558
  %1560 = vmatprep.mubr.bf16.mxu0 %v966
  %1561 = vmatmul.mubr.bf16.gmra.mrb[0].mxu0 %v965
  %v1562 = vpop.f32.mrb[0].mxu0
  %v1563 = vadd.f32 %v1450, %v1562
  %v1564 = vpop.f32.mrb[0].mxu0
  %v1565 = vadd.f32 %v1452, %v1564
  %v1566 = vpop.f32.mrb[0].mxu0
  %v1567 = vadd.f32 %v1454, %v1566
  %v1568 = vpop.f32.mrb[0].mxu0
  %v1569 = vadd.f32 %v1456, %v1568
  %1570 = vmatprep.mubr.bf16.mxu0 %v970
  %1571 = vmatmul.mubr.bf16.gmra.mrb[0].mxu0 %v969
  %v1572 = vpop.f32.mrb[0].mxu0
  %v1573 = vadd.f32 %v1460, %v1572
  %v1574 = vpop.f32.mrb[0].mxu0
  %v1575 = vadd.f32 %v1462, %v1574
  %v1576 = vpop.f32.mrb[0].mxu0
  %v1577 = vadd.f32 %v1464, %v1576
  %v1578 = vpop.f32.mrb[0].mxu0
  %v1579 = vadd.f32 %v1466, %v1578
  %1580 = vmatprep.mubr.bf16.mxu0 %v974
  %1581 = vmatmul.mubr.bf16.gmra.mrb[0].mxu0 %v973
  %v1582 = vpop.f32.mrb[0].mxu0
  %v1583 = vadd.f32 %v1470, %v1582
  %v1584 = vpop.f32.mrb[0].mxu0
  %v1585 = vadd.f32 %v1472, %v1584
  %v1586 = vpop.f32.mrb[0].mxu0
  %v1587 = vadd.f32 %v1474, %v1586
  %v1588 = vpop.f32.mrb[0].mxu0
  %v1589 = vadd.f32 %v1476, %v1588
  %1590 = vmatprep.mubr.bf16.mxu0 %v978
  %1591 = vmatmul.mubr.bf16.gmra.mrb[0].mxu0 %v977
  %v1592 = vpop.f32.mrb[0].mxu0
  %v1593 = vadd.f32 %v1480, %v1592
  %v1594 = vpop.f32.mrb[0].mxu0
  %v1595 = vadd.f32 %v1482, %v1594
  %v1596 = vpop.f32.mrb[0].mxu0
  %v1597 = vadd.f32 %v1484, %v1596
  %v1598 = vpop.f32.mrb[0].mxu0
  %v1599 = vadd.f32 %v1486, %v1598
  %1600 = vdwg.mxu0
  %vm1601 = vcmp.gt.f32.partialorder %v1523, 0.0
  %vm1602 = vcmp.gt.f32.partialorder %v1525, 0.0
  %vm1603 = vcmp.gt.f32.partialorder %v1527, 0.0
  %vm1604 = vcmp.gt.f32.partialorder %v1529, 0.0
  %vm1605 = vcmp.gt.f32.partialorder %v1533, 0.0
  %vm1606 = vcmp.gt.f32.partialorder %v1535, 0.0
  %vm1607 = vcmp.gt.f32.partialorder %v1537, 0.0
  %vm1608 = vcmp.gt.f32.partialorder %v1539, 0.0
  %vm1609 = vcmp.gt.f32.partialorder %v1543, 0.0
  %vm1610 = vcmp.gt.f32.partialorder %v1545, 0.0
  %vm1611 = vcmp.gt.f32.partialorder %v1547, 0.0
  %vm1612 = vcmp.gt.f32.partialorder %v1549, 0.0
  %vm1613 = vcmp.gt.f32.partialorder %v1553, 0.0
  %vm1614 = vcmp.gt.f32.partialorder %v1555, 0.0
  %vm1615 = vcmp.gt.f32.partialorder %v1557, 0.0
  %vm1616 = vcmp.gt.f32.partialorder %v1559, 0.0
  %vm1617 = vcmp.gt.f32.partialorder %v1563, 0.0
  %vm1618 = vcmp.gt.f32.partialorder %v1565, 0.0
  %vm1619 = vcmp.gt.f32.partialorder %v1567, 0.0
  %vm1620 = vcmp.gt.f32.partialorder %v1569, 0.0
  %vm1621 = vcmp.gt.f32.partialorder %v1573, 0.0
  %vm1622 = vcmp.gt.f32.partialorder %v1575, 0.0
  %vm1623 = vcmp.gt.f32.partialorder %v1577, 0.0
  %vm1624 = vcmp.gt.f32.partialorder %v1579, 0.0
  %vm1625 = vcmp.gt.f32.partialorder %v1583, 0.0
  %vm1626 = vcmp.gt.f32.partialorder %v1585, 0.0
  %vm1627 = vcmp.gt.f32.partialorder %v1587, 0.0
  %vm1628 = vcmp.gt.f32.partialorder %v1589, 0.0
  %vm1629 = vcmp.gt.f32.partialorder %v1593, 0.0
  %vm1630 = vcmp.gt.f32.partialorder %v1595, 0.0
  %vm1631 = vcmp.gt.f32.partialorder %v1597, 0.0
  %vm1632 = vcmp.gt.f32.partialorder %v1599, 0.0
  %v1633 = vmul.f32 %v1523, 0.2
  %v1634 = vmul.f32 %v1525, 0.2
  %v1635 = vmul.f32 %v1527, 0.2
  %v1636 = vmul.f32 %v1529, 0.2
  %v1637 = vmul.f32 %v1533, 0.2
  %v1638 = vmul.f32 %v1535, 0.2
  %v1639 = vmul.f32 %v1537, 0.2
  %v1640 = vmul.f32 %v1539, 0.2
  %v1641 = vmul.f32 %v1543, 0.2
  %v1642 = vmul.f32 %v1545, 0.2
  %v1643 = vmul.f32 %v1547, 0.2
  %v1644 = vmul.f32 %v1549, 0.2
  %v1645 = vmul.f32 %v1553, 0.2
  %v1646 = vmul.f32 %v1555, 0.2
  %v1647 = vmul.f32 %v1557, 0.2
  %v1648 = vmul.f32 %v1559, 0.2
  %v1649 = vmul.f32 %v1563, 0.2
  %v1650 = vmul.f32 %v1565, 0.2
  %v1651 = vmul.f32 %v1567, 0.2
  %v1652 = vmul.f32 %v1569, 0.2
  %v1653 = vmul.f32 %v1573, 0.2
  %v1654 = vmul.f32 %v1575, 0.2
  %v1655 = vmul.f32 %v1577, 0.2
  %v1656 = vmul.f32 %v1579, 0.2
  %v1657 = vmul.f32 %v1583, 0.2
  %v1658 = vmul.f32 %v1585, 0.2
  %v1659 = vmul.f32 %v1587, 0.2
  %v1660 = vmul.f32 %v1589, 0.2
  %v1661 = vmul.f32 %v1593, 0.2
  %v1662 = vmul.f32 %v1595, 0.2
  %v1663 = vmul.f32 %v1597, 0.2
  %v1664 = vmul.f32 %v1599, 0.2
  %v1665 = vsel %vm1601, %v1523, %v1633
  %v1666 = vsel %vm1602, %v1525, %v1634
  %v1667 = vsel %vm1603, %v1527, %v1635
  %v1668 = vsel %vm1604, %v1529, %v1636
  %v1669 = vsel %vm1605, %v1533, %v1637
  %v1670 = vsel %vm1606, %v1535, %v1638
  %v1671 = vsel %vm1607, %v1537, %v1639
  %v1672 = vsel %vm1608, %v1539, %v1640
  %v1673 = vsel %vm1609, %v1543, %v1641
  %v1674 = vsel %vm1610, %v1545, %v1642
  %v1675 = vsel %vm1611, %v1547, %v1643
  %v1676 = vsel %vm1612, %v1549, %v1644
  %v1677 = vsel %vm1613, %v1553, %v1645
  %v1678 = vsel %vm1614, %v1555, %v1646
  %v1679 = vsel %vm1615, %v1557, %v1647
  %v1680 = vsel %vm1616, %v1559, %v1648
  %v1681 = vsel %vm1617, %v1563, %v1649
  %v1682 = vsel %vm1618, %v1565, %v1650
  %v1683 = vsel %vm1619, %v1567, %v1651
  %v1684 = vsel %vm1620, %v1569, %v1652
  %v1685 = vsel %vm1621, %v1573, %v1653
  %v1686 = vsel %vm1622, %v1575, %v1654
  %v1687 = vsel %vm1623, %v1577, %v1655
  %v1688 = vsel %vm1624, %v1579, %v1656
  %v1689 = vsel %vm1625, %v1583, %v1657
  %v1690 = vsel %vm1626, %v1585, %v1658
  %v1691 = vsel %vm1627, %v1587, %v1659
  %v1692 = vsel %vm1628, %v1589, %v1660
  %v1693 = vsel %vm1629, %v1593, %v1661
  %v1694 = vsel %vm1630, %v1595, %v1662
  %v1695 = vsel %vm1631, %v1597, %v1663
  %v1696 = vsel %vm1632, %v1599, %v1664
  %v1697 = vpack.c.bf16 %v1667, %v1665
  %v1698 = vpack.c.bf16 %v1668, %v1666
  %v1699 = vpack.c.bf16 %v1671, %v1669
  %v1700 = vpack.c.bf16 %v1672, %v1670
  %v1701 = vpack.c.bf16 %v1675, %v1673
  %v1702 = vpack.c.bf16 %v1676, %v1674
  %v1703 = vpack.c.bf16 %v1679, %v1677
  %v1704 = vpack.c.bf16 %v1680, %v1678
  %v1705 = vpack.c.bf16 %v1683, %v1681
  %v1706 = vpack.c.bf16 %v1684, %v1682
  %v1707 = vpack.c.bf16 %v1687, %v1685
  %v1708 = vpack.c.bf16 %v1688, %v1686
  %v1709 = vpack.c.bf16 %v1691, %v1689
  %v1710 = vpack.c.bf16 %v1692, %v1690
  %v1711 = vpack.c.bf16 %v1695, %v1693
  %v1712 = vpack.c.bf16 %v1696, %v1694
  %v1713 = vld [vmem:[%s5] sm:$0xf]
  %v1714 = vld [vmem:[%s5 + $0x4] sm:$0xf]
  %v1715 = vld [vmem:[%s5 + $0x8] sm:$0xf]
  %v1716 = vld [vmem:[%s5 + $0xc] sm:$0xf]
  %v1717 = vld [vmem:[%s5 + $0x10] sm:$0xf]
  %v1718 = vld [vmem:[%s5 + $0x14] sm:$0xf]
  %v1719 = vld [vmem:[%s5 + $0x18] sm:$0xf]
  %v1720 = vld [vmem:[%s5 + $0x1c] sm:$0xf]
  %v1721 = vld [vmem:[%s5 + $0x20] sm:$0xf]
  %v1722 = vld [vmem:[%s5 + $0x24] sm:$0xf]
  %v1723 = vld [vmem:[%s5 + $0x28] sm:$0xf]
  %v1724 = vld [vmem:[%s5 + $0x2c] sm:$0xf]
  %v1725 = vld [vmem:[%s5 + $0x30] sm:$0xf]
  %v1726 = vld [vmem:[%s5 + $0x34] sm:$0xf]
  %v1727 = vld [vmem:[%s5 + $0x38] sm:$0xf]
  %v1728 = vld [vmem:[%s5 + $0x3c] sm:$0xf]
  %v1729 = vld [vmem:[%s5 + $0x40] sm:$0xf]
  %v1730 = vld [vmem:[%s5 + $0x44] sm:$0xf]
  %v1731 = vld [vmem:[%s5 + $0x48] sm:$0xf]
  %v1732 = vld [vmem:[%s5 + $0x4c] sm:$0xf]
  %v1733 = vld [vmem:[%s5 + $0x50] sm:$0xf]
  %v1734 = vld [vmem:[%s5 + $0x54] sm:$0xf]
  %v1735 = vld [vmem:[%s5 + $0x58] sm:$0xf]
  %v1736 = vld [vmem:[%s5 + $0x5c] sm:$0xf]
  %v1737 = vld [vmem:[%s5 + $0x60] sm:$0xf]
  %v1738 = vld [vmem:[%s5 + $0x64] sm:$0xf]
  %v1739 = vld [vmem:[%s5 + $0x68] sm:$0xf]
  %v1740 = vld [vmem:[%s5 + $0x6c] sm:$0xf]
  %v1741 = vld [vmem:[%s5 + $0x70] sm:$0xf]
  %v1742 = vld [vmem:[%s5 + $0x74] sm:$0xf]
  %v1743 = vld [vmem:[%s5 + $0x78] sm:$0xf]
  %v1744 = vld [vmem:[%s5 + $0x7c] sm:$0xf]
  %v1745 = vld [vmem:[%s6] sm:$0x1]
  %v1747 = vlaneseq
  %v1748 = vshrl.u32 %v1747, 7
  %v1749 = vsub.s32 0, %v1748
  %v1750 = vrot.slane %v1745, %v1749
  %v1784 = vunpack.c.l.b16 %v1713
  %v1785 = vunpack.c.l.b16 %v1714
  %v1786 = vunpack.c.l.b16 %v1715
  %v1787 = vunpack.c.l.b16 %v1716
  %v1788 = vunpack.c.l.b16 %v1717
  %v1789 = vunpack.c.l.b16 %v1718
  %v1790 = vunpack.c.l.b16 %v1719
  %v1791 = vunpack.c.l.b16 %v1720
  %v1792 = vunpack.c.l.b16 %v1721
  %v1793 = vunpack.c.l.b16 %v1722
  %v1794 = vunpack.c.l.b16 %v1723
  %v1795 = vunpack.c.l.b16 %v1724
  %v1796 = vunpack.c.l.b16 %v1725
  %v1797 = vunpack.c.l.b16 %v1726
  %v1798 = vunpack.c.l.b16 %v1727
  %v1799 = vunpack.c.l.b16 %v1728
  %v1800 = vunpack.c.l.b16 %v1729
  %v1801 = vunpack.c.l.b16 %v1730
  %v1802 = vunpack.c.l.b16 %v1731
  %v1803 = vunpack.c.l.b16 %v1732
  %v1804 = vunpack.c.l.b16 %v1733
  %v1805 = vunpack.c.l.b16 %v1734
  %v1806 = vunpack.c.l.b16 %v1735
  %v1807 = vunpack.c.l.b16 %v1736
  %v1808 = vunpack.c.l.b16 %v1737
  %v1809 = vunpack.c.l.b16 %v1738
  %v1810 = vunpack.c.l.b16 %v1739
  %v1811 = vunpack.c.l.b16 %v1740
  %v1812 = vunpack.c.l.b16 %v1741
  %v1813 = vunpack.c.l.b16 %v1742
  %v1814 = vunpack.c.l.b16 %v1743
  %v1815 = vunpack.c.l.b16 %v1744
  %v1816 = vpack.c.b16 %v1785, %v1784
  %v1817 = vpack.c.b16 %v1787, %v1786
  %v1818 = vpack.c.b16 %v1789, %v1788
  %v1819 = vpack.c.b16 %v1791, %v1790
  %v1820 = vpack.c.b16 %v1793, %v1792
  %v1821 = vpack.c.b16 %v1795, %v1794
  %v1822 = vpack.c.b16 %v1797, %v1796
  %v1823 = vpack.c.b16 %v1799, %v1798
  %v1824 = vpack.c.b16 %v1801, %v1800
  %v1825 = vpack.c.b16 %v1803, %v1802
  %v1826 = vpack.c.b16 %v1805, %v1804
  %v1827 = vpack.c.b16 %v1807, %v1806
  %v1828 = vpack.c.b16 %v1809, %v1808
  %v1829 = vpack.c.b16 %v1811, %v1810
  %v1830 = vpack.c.b16 %v1813, %v1812
  %v1831 = vpack.c.b16 %v1815, %v1814
  %1848 = vmatprep.subr.bf16.mxu0 0
  %1849 = vmatpush1.bf16.msra.mxu0 %v1816
  %1850 = vmatprep.subr.bf16.mxu0 0
  %1851 = vmatpush1.bf16.msra.mxu0 %v1817
  %1852 = vmatprep.subr.bf16.mxu0 0
  %1853 = vmatpush1.bf16.msra.mxu0 %v1818
  %1854 = vmatprep.subr.bf16.mxu0 0
  %1855 = vmatpush1.bf16.msra.mxu0 %v1819
  %1856 = vmatprep.subr.bf16.mxu0 0
  %1857 = vmatpush1.bf16.msra.mxu0 %v1820
  %1858 = vmatprep.subr.bf16.mxu0 0
  %1859 = vmatpush1.bf16.msra.mxu0 %v1821
  %1860 = vmatprep.subr.bf16.mxu0 0
  %1861 = vmatpush1.bf16.msra.mxu0 %v1822
  %1862 = vmatprep.subr.bf16.mxu0 0
  %1863 = vmatpush1.bf16.msra.mxu0 %v1823
  %1864 = vmatprep.subr.bf16.mxu0 0
  %1865 = vmatpush1.bf16.msra.mxu0 %v1824
  %1866 = vmatprep.subr.bf16.mxu0 0
  %1867 = vmatpush1.bf16.msra.mxu0 %v1825
  %1868 = vmatprep.subr.bf16.mxu0 0
  %1869 = vmatpush1.bf16.msra.mxu0 %v1826
  %1870 = vmatprep.subr.bf16.mxu0 0
  %1871 = vmatpush1.bf16.msra.mxu0 %v1827
  %1872 = vmatprep.subr.bf16.mxu0 0
  %1873 = vmatpush1.bf16.msra.mxu0 %v1828
  %1874 = vmatprep.subr.bf16.mxu0 0
  %1875 = vmatpush1.bf16.msra.mxu0 %v1829
  %1876 = vmatprep.subr.bf16.mxu0 0
  %1877 = vmatpush1.bf16.msra.mxu0 %v1830
  %1878 = vmatprep.subr.bf16.mxu0 0
  %1879 = vmatpush1.bf16.msra.mxu0 %v1831
  %1880 = vmatprep.mubr.bf16.mxu0 %v1698
  %1881 = vmatmul.mubr.bf16.gmra.mrb[0].mxu0 %v1697
  %v1882 = vpop.f32.mrb[0].mxu0
  %v1883 = vadd.f32 %v1750, %v1882
  %v1884 = vpop.f32.mrb[0].mxu0
  %v1885 = vpop.f32.mrb[0].mxu0
  %v1886 = vadd.f32 %v1750, %v1885
  %v1887 = vpop.f32.mrb[0].mxu0
  %1888 = vmatprep.mubr.bf16.mxu0 %v1700
  %1889 = vmatmul.mubr.bf16.gmra.mrb[0].mxu0 %v1699
  %v1890 = vpop.f32.mrb[0].mxu0
  %v1891 = vadd.f32 %v1750, %v1890
  %v1892 = vpop.f32.mrb[0].mxu0
  %v1893 = vpop.f32.mrb[0].mxu0
  %v1894 = vadd.f32 %v1750, %v1893
  %v1895 = vpop.f32.mrb[0].mxu0
  %1896 = vmatprep.mubr.bf16.mxu0 %v1702
  %1897 = vmatmul.mubr.bf16.gmra.mrb[0].mxu0 %v1701
  %v1898 = vpop.f32.mrb[0].mxu0
  %v1899 = vadd.f32 %v1750, %v1898
  %v1900 = vpop.f32.mrb[0].mxu0
  %v1901 = vpop.f32.mrb[0].mxu0
  %v1902 = vadd.f32 %v1750, %v1901
  %v1903 = vpop.f32.mrb[0].mxu0
  %1904 = vmatprep.mubr.bf16.mxu0 %v1704
  %1905 = vmatmul.mubr.bf16.gmra.mrb[0].mxu0 %v1703
  %v1906 = vpop.f32.mrb[0].mxu0
  %v1907 = vadd.f32 %v1750, %v1906
  %v1908 = vpop.f32.mrb[0].mxu0
  %v1909 = vpop.f32.mrb[0].mxu0
  %v1910 = vadd.f32 %v1750, %v1909
  %v1911 = vpop.f32.mrb[0].mxu0
  %1912 = vmatprep.mubr.bf16.mxu0 %v1706
  %1913 = vmatmul.mubr.bf16.gmra.mrb[0].mxu0 %v1705
  %v1914 = vpop.f32.mrb[0].mxu0
  %v1915 = vadd.f32 %v1750, %v1914
  %v1916 = vpop.f32.mrb[0].mxu0
  %v1917 = vpop.f32.mrb[0].mxu0
  %v1918 = vadd.f32 %v1750, %v1917
  %v1919 = vpop.f32.mrb[0].mxu0
  %1920 = vmatprep.mubr.bf16.mxu0 %v1708
  %1921 = vmatmul.mubr.bf16.gmra.mrb[0].mxu0 %v1707
  %v1922 = vpop.f32.mrb[0].mxu0
  %v1923 = vadd.f32 %v1750, %v1922
  %v1924 = vpop.f32.mrb[0].mxu0
  %v1925 = vpop.f32.mrb[0].mxu0
  %v1926 = vadd.f32 %v1750, %v1925
  %v1927 = vpop.f32.mrb[0].mxu0
  %1928 = vmatprep.mubr.bf16.mxu0 %v1710
  %1929 = vmatmul.mubr.bf16.gmra.mrb[0].mxu0 %v1709
  %v1930 = vpop.f32.mrb[0].mxu0
  %v1931 = vadd.f32 %v1750, %v1930
  %v1932 = vpop.f32.mrb[0].mxu0
  %v1933 = vpop.f32.mrb[0].mxu0
  %v1934 = vadd.f32 %v1750, %v1933
  %v1935 = vpop.f32.mrb[0].mxu0
  %1936 = vmatprep.mubr.bf16.mxu0 %v1712
  %1937 = vmatmul.mubr.bf16.gmra.mrb[0].mxu0 %v1711
  %v1938 = vpop.f32.mrb[0].mxu0
  %v1939 = vadd.f32 %v1750, %v1938
  %v1940 = vpop.f32.mrb[0].mxu0
  %v1941 = vpop.f32.mrb[0].mxu0
  %v1942 = vadd.f32 %v1750, %v1941
  %v1943 = vpop.f32.mrb[0].mxu0
  %1944 = vdwg.mxu0
  %v1945 = vxor.u32 %v1883, 2147483648
  %v1946 = vxor.u32 %v1886, 2147483648
  %v1947 = vxor.u32 %v1891, 2147483648
  %v1948 = vxor.u32 %v1894, 2147483648
  %v1949 = vxor.u32 %v1899, 2147483648
  %v1950 = vxor.u32 %v1902, 2147483648
  %v1951 = vxor.u32 %v1907, 2147483648
  %v1952 = vxor.u32 %v1910, 2147483648
  %v1953 = vxor.u32 %v1915, 2147483648
  %v1954 = vxor.u32 %v1918, 2147483648
  %v1955 = vxor.u32 %v1923, 2147483648
  %v1956 = vxor.u32 %v1926, 2147483648
  %v1957 = vxor.u32 %v1931, 2147483648
  %v1958 = vxor.u32 %v1934, 2147483648
  %v1959 = vxor.u32 %v1939, 2147483648
  %v1960 = vxor.u32 %v1942, 2147483648
  %v1961 = vmul.f32 %v1945, 1.442695
  %v1962 = vpow.pop %v1961
  %v1963 = vmul.f32 %v1946, 1.442695
  %v1964 = vpow.pop %v1963
  %v1965 = vmul.f32 %v1947, 1.442695
  %v1966 = vpow.pop %v1965
  %v1967 = vmul.f32 %v1948, 1.442695
  %v1968 = vpow.pop %v1967
  %v1969 = vmul.f32 %v1949, 1.442695
  %v1970 = vpow.pop %v1969
  %v1971 = vmul.f32 %v1950, 1.442695
  %v1972 = vpow.pop %v1971
  %v1973 = vmul.f32 %v1951, 1.442695
  %v1974 = vpow.pop %v1973
  %v1975 = vmul.f32 %v1952, 1.442695
  %v1976 = vpow.pop %v1975
  %v1977 = vmul.f32 %v1953, 1.442695
  %v1978 = vpow.pop %v1977
  %v1979 = vmul.f32 %v1954, 1.442695
  %v1980 = vpow.pop %v1979
  %v1981 = vmul.f32 %v1955, 1.442695
  %v1982 = vpow.pop %v1981
  %v1983 = vmul.f32 %v1956, 1.442695
  %v1984 = vpow.pop %v1983
  %v1985 = vmul.f32 %v1957, 1.442695
  %v1986 = vpow.pop %v1985
  %v1987 = vmul.f32 %v1958, 1.442695
  %v1988 = vpow.pop %v1987
  %v1989 = vmul.f32 %v1959, 1.442695
  %v1990 = vpow.pop %v1989
  %v1991 = vmul.f32 %v1960, 1.442695
  %v1992 = vpow.pop %v1991
  %v1993 = vadd.f32 %v1962, 1.0
  %v1994 = vadd.f32 %v1964, 1.0
  %v1995 = vadd.f32 %v1966, 1.0
  %v1996 = vadd.f32 %v1968, 1.0
  %v1997 = vadd.f32 %v1970, 1.0
  %v1998 = vadd.f32 %v1972, 1.0
  %v1999 = vadd.f32 %v1974, 1.0
  %v2000 = vadd.f32 %v1976, 1.0
  %v2001 = vadd.f32 %v1978, 1.0
  %v2002 = vadd.f32 %v1980, 1.0
  %v2003 = vadd.f32 %v1982, 1.0
  %v2004 = vadd.f32 %v1984, 1.0
  %v2005 = vadd.f32 %v1986, 1.0
  %v2006 = vadd.f32 %v1988, 1.0
  %v2007 = vadd.f32 %v1990, 1.0
  %v2008 = vadd.f32 %v1992, 1.0
  %v2009 = vrcp.pop %v1993
  %v2010 = vmul.f32 1.0, %v2009
  %v2011 = vrcp.pop %v1994
  %v2012 = vmul.f32 1.0, %v2011
  %v2013 = vrcp.pop %v1995
  %v2014 = vmul.f32 1.0, %v2013
  %v2015 = vrcp.pop %v1996
  %v2016 = vmul.f32 1.0, %v2015
  %v2017 = vrcp.pop %v1997
  %v2018 = vmul.f32 1.0, %v2017
  %v2019 = vrcp.pop %v1998
  %v2020 = vmul.f32 1.0, %v2019
  %v2021 = vrcp.pop %v1999
  %v2022 = vmul.f32 1.0, %v2021
  %v2023 = vrcp.pop %v2000
  %v2024 = vmul.f32 1.0, %v2023
  %v2025 = vrcp.pop %v2001
  %v2026 = vmul.f32 1.0, %v2025
  %v2027 = vrcp.pop %v2002
  %v2028 = vmul.f32 1.0, %v2027
  %v2029 = vrcp.pop %v2003
  %v2030 = vmul.f32 1.0, %v2029
  %v2031 = vrcp.pop %v2004
  %v2032 = vmul.f32 1.0, %v2031
  %v2033 = vrcp.pop %v2005
  %v2034 = vmul.f32 1.0, %v2033
  %v2035 = vrcp.pop %v2006
  %v2036 = vmul.f32 1.0, %v2035
  %v2037 = vrcp.pop %v2007
  %v2038 = vmul.f32 1.0, %v2037
  %v2039 = vrcp.pop %v2008
  %v2040 = vmul.f32 1.0, %v2039
  %2041 = vst [vmem:[%s7] sm:$0xff] %v2010
  %2042 = vst [vmem:[%s7 + $0x8] sm:$0xff] %v2012
  %2043 = vst [vmem:[%s7 + $0x10] sm:$0xff] %v2014
  %2044 = vst [vmem:[%s7 + $0x18] sm:$0xff] %v2016
  %2045 = vst [vmem:[%s7 + $0x20] sm:$0xff] %v2018
  %2046 = vst [vmem:[%s7 + $0x28] sm:$0xff] %v2020
  %2047 = vst [vmem:[%s7 + $0x30] sm:$0xff] %v2022
  %2048 = vst [vmem:[%s7 + $0x38] sm:$0xff] %v2024
  %2049 = vst [vmem:[%s7 + $0x40] sm:$0xff] %v2026
  %2050 = vst [vmem:[%s7 + $0x48] sm:$0xff] %v2028
  %2051 = vst [vmem:[%s7 + $0x50] sm:$0xff] %v2030
  %2052 = vst [vmem:[%s7 + $0x58] sm:$0xff] %v2032
  %2053 = vst [vmem:[%s7 + $0x60] sm:$0xff] %v2034
  %2054 = vst [vmem:[%s7 + $0x68] sm:$0xff] %v2036
  %2055 = vst [vmem:[%s7 + $0x70] sm:$0xff] %v2038
  %2056 = vst [vmem:[%s7 + $0x78] sm:$0xff] %v2040
  // Predicated region
  $region30: #{discriminator_forward.1} parent=0 // pred_check
    _
  $region31: #{discriminator_forward.1} parent=0 // pred_check_branch
    %2058 = sbr.rel (0) target = $region33
  $region32: #{discriminator_forward.1} parent=0 // pred_region
    _
  $region33: #{discriminator_forward.1} parent=0 // pred_fallthru
    _
  // Predicated region
  $region34: #{discriminator_forward.1} parent=0 // pred_check
    _
  $region35: #{discriminator_forward.1} parent=0 // pred_check_branch
    %2060 = sbr.rel (0) target = $region37
  $region36: #{discriminator_forward.1} parent=0 // pred_region
    _
  $region37: #{discriminator_forward.1} parent=0 // pred_fallthru
    _

</llo_original>
